<compile_context>
chip_gen: v7x
topology: tpu7x:2x2x1
jax: 0.10.0
libtpu: 0.0.40
codegen_flags: <defaults>
</compile_context>

<pallas_src>
import numpy as np
import jax
import jax.numpy as jnp
from jax import lax
from jax.experimental import pallas as pl
from jax.experimental.pallas import tpu as pltpu

START_TAG = '<START>'
STOP_TAG = '<STOP>'
tag_to_ix = {'B': 0, 'I': 1, 'O': 2, START_TAG: 3, STOP_TAG: 4}
TAGS = len(tag_to_ix)
START_IDX = tag_to_ix[START_TAG]
STOP_IDX = tag_to_ix[STOP_TAG]

# Perf knob (review: big MXU win on v6e/v7x, but feats move ~1e-3 and Viterbi
# near-ties may flip vs. the exact f32 reference) -> gated, default off.
USE_BF16_LSTM_MATMUL = False


def _bilstm_crf_kernel(x_ref, wih_ref, whh_ref, b_ref,
                       h2tw_ref, h2tb_ref, trans_ref, trans_stop_ref,
                       feats_ref, bptrs_ref, term_ref,
                       xp_ref, out_ref):
    T = x_ref.shape[0]
    H2 = whh_ref.shape[0]          # 2H (fwd|bwd concatenated hidden)
    H = H2 // 2

    # ---- fused input projection for BOTH directions: one (T,2E)@(2E,8H) matmul ----
    # x_ref row t = [x[t] | x[T-1-t]]  ->  xp row t = [fwd gates from x[t] | bwd gates
    # from x[T-1-t]] interleaved per gate; bias already folded in.
    xp_ref[...] = (jnp.dot(x_ref[...], wih_ref[...],
                           preferred_element_type=jnp.float32) + b_ref[...])

    whh = whh_ref[...]             # (2H, 8H) block-diagonal recurrent weight

    # Gate layout along 8H: [i(2H), f(2H), o(2H), g(2H)], each 2H block = [fwd_H | bwd_H].
    def step(t, carry):
        h_cat, c_cat = carry
        gates = xp_ref[pl.ds(t, 1), :] + jnp.dot(
            h_cat.astype(whh.dtype), whh, preferred_element_type=jnp.float32)  # (1, 8H)
        sig = jax.nn.sigmoid(gates[:, :3 * H2])     # i,f,o of both directions
        g_cell = jnp.tanh(gates[:, 3 * H2:])        # g of both directions (1, 2H)
        i_cat = sig[:, :H2]
        f_cat = sig[:, H2:2 * H2]
        o_cat = sig[:, 2 * H2:3 * H2]
        c_cat = f_cat * c_cat + i_cat * g_cell
        h_cat = o_cat * jnp.tanh(c_cat)
        out_ref[pl.ds(t, 1), pl.ds(0, H)] = h_cat[:, :H]           # fwd at time t
        out_ref[pl.ds(T - 1 - t, 1), pl.ds(H, H)] = h_cat[:, H:]   # bwd at time T-1-t
        return h_cat, c_cat

    h0 = jnp.zeros((1, H2), jnp.float32)
    c0 = jnp.zeros((1, H2), jnp.float32)
    # Full unroll is fine at small T; bounded unroll avoids vreg spills for long T.
    lax.fori_loop(0, T, step, (h0, c0), unroll=True if T <= 16 else 8)

    # ---- hidden2tag: single (T,2H)@(2H,TAGS) matmul ----
    feats = (jnp.dot(out_ref[...], h2tw_ref[...],
                     preferred_element_type=jnp.float32) + h2tb_ref[...])
    feats_ref[...] = feats

    # ---- CRF Viterbi forward recursion (vectorized over tags) ----
    trans = trans_ref[...]                                        # (TAGS, TAGS)
    col_iota = lax.broadcasted_iota(jnp.int32, (TAGS, TAGS), 1)
    row_iota = lax.broadcasted_iota(jnp.int32, (TAGS, TAGS), 0)
    eye = row_iota == col_iota
    lane_iota = lax.broadcasted_iota(jnp.int32, (1, TAGS), 1)

    fv = jnp.where(lane_iota == START_IDX,
                   jnp.float32(0.0), jnp.float32(-10000.0))       # (1, TAGS)
    bp_cols = []
    for t in range(T):
        mat = fv + trans                                          # mat[j,i] = fv[i] + trans[j,i]
        vmax = jnp.max(mat, axis=-1, keepdims=True)               # (TAGS, 1)
        bp = jnp.min(jnp.where(mat == vmax, col_iota, TAGS),      # first-argmax, (TAGS, 1)
                     axis=-1, keepdims=True)
        bp_cols.append(bp)                                        # keep as column; no per-step XLU redistribution
        # transpose-free column -> row for the value path only
        vmax_row = jnp.sum(jnp.where(eye, vmax, 0.0), axis=0, keepdims=True)   # (1, TAGS)
        fv = vmax_row + feats[t:t + 1, :]
    bptrs_ref[...] = jnp.concatenate(bp_cols, axis=1).astype(jnp.int32)        # (TAGS, T), one store
    term_ref[...] = fv + trans_stop_ref[...]


def _pack_bidir(p, H, E):
    """Pack both LSTM directions into fused weights.

    Gate order (i, f, o, g) == torch rows (0, 1, 3, 2); within each gate the 2H lanes
    are [fwd_H | bwd_H].  Returns:
      wih_big  (2E, 8H): rows 0:E act on x[t] (fwd cols), rows E:2E act on x[T-1-t] (bwd cols)
      whh_bd   (2H, 8H): block-diagonal -> fwd cols only see hf, bwd cols only see hb
      b_cat    (1, 8H) : b_ih + b_hh, same layout
    """
    order = (0, 1, 3, 2)
    zE = jnp.zeros((E, H), jnp.float32)
    zH = jnp.zeros((H, H), jnp.float32)
    wih_blocks, whh_blocks, b_blocks = [], [], []
    for g in order:
        sl = slice(g * H, (g + 1) * H)
        wf = p['w_ih_f'][sl, :].T              # (E, H)
        wb = p['w_ih_b'][sl, :].T
        wih_blocks.append(jnp.concatenate([
            jnp.concatenate([wf, zE], axis=1),
            jnp.concatenate([zE, wb], axis=1)], axis=0))          # (2E, 2H)
        rf = p['w_hh_f'][sl, :].T              # (H, H)
        rb = p['w_hh_b'][sl, :].T
        whh_blocks.append(jnp.concatenate([
            jnp.concatenate([rf, zH], axis=1),
            jnp.concatenate([zH, rb], axis=1)], axis=0))          # (2H, 2H)
        bf = p['b_ih_f'][sl] + p['b_hh_f'][sl]
        bb = p['b_ih_b'][sl] + p['b_hh_b'][sl]
        b_blocks.append(jnp.concatenate([bf, bb]))
    wih_big = jnp.concatenate(wih_blocks, axis=1)                 # (2E, 8H)
    whh_bd = jnp.concatenate(whh_blocks, axis=1)                  # (2H, 8H)
    b_cat = jnp.concatenate(b_blocks)[None, :]                    # (1, 8H)
    return wih_big, whh_bd, b_cat


@jax.jit
def _forward_device(sentence, params):
    T = sentence.shape[0]
    H = params['w_hh_f'].shape[1]
    E = params['emb'].shape[1]

    wih_big, whh_bd, b_cat = _pack_bidir(params, H, E)
    h2t_wt = params['h2t_w'].T                     # (2H, TAGS), rows = [fwd | bwd]
    h2tb = params['h2t_b'][None, :]
    trans = params['trans']
    trans_stop = trans[STOP_IDX][None, :]          # pre-sliced (1, TAGS)

    # embedding gather outside the kernel: only the T needed rows enter VMEM
    x = jnp.take(params['emb'], sentence.astype(jnp.int32), axis=0).astype(jnp.float32)
    x_pair = jnp.concatenate([x, x[::-1]], axis=1)  # (T, 2E): [x[t] | x[T-1-t]]

    if USE_BF16_LSTM_MATMUL:
        x_pair = x_pair.astype(jnp.bfloat16)
        wih_big = wih_big.astype(jnp.bfloat16)
        whh_bd = whh_bd.astype(jnp.bfloat16)

    vmem = pl.BlockSpec(memory_space=pltpu.MemorySpace.VMEM)
    # TODO(synk): for multi-sentence throughput, add a batch grid axis with
    #             dimension_semantics=("parallel",) so v7x's two TensorCores are used.
    # TODO(synk): for long sequences, chunk the (T, 8H) projection scratch over T
    #             (pltpu.emit_pipeline) to stay under v7x's 64 MiB VMEM.
    feats, bptrs, term = pl.pallas_call(
        _bilstm_crf_kernel,
        out_shape=(
            jax.ShapeDtypeStruct((T, TAGS), jnp.float32),
            jax.ShapeDtypeStruct((TAGS, T), jnp.int32),     # backpointers stored transposed
            jax.ShapeDtypeStruct((1, TAGS), jnp.float32),
        ),
        in_specs=[vmem] * 8,
        out_specs=(vmem, vmem, vmem),
        scratch_shapes=[pltpu.VMEM((T, 8 * H), jnp.float32),   # fused input projections
                        pltpu.VMEM((T, 2 * H), jnp.float32)],  # [fwd|bwd] hidden states
        compiler_params=pltpu.CompilerParams(vmem_limit_bytes=32 * 1024 * 1024),
    )(x_pair, wih_big, whh_bd, b_cat, h2t_wt, h2tb, trans, trans_stop)

    # On-device Viterbi backtracking (bptrs is (TAGS, T) -> index [tag, t]).
    best_tag = jnp.argmax(term[0]).astype(jnp.int32)
    path_score = term[0, best_tag]
    path0 = jnp.zeros((T,), jnp.int32).at[T - 1].set(best_tag)
    idx = jnp.arange(T, dtype=jnp.int32)

    def bt_body(i, carry):
        tag, path = carry
        t = T - 1 - i
        prev = bptrs[tag, t]
        path = jnp.where(idx == (t - 1), prev, path)   # t-1 == -1 on last iter -> no-op
        return prev, path

    start_tag, path = lax.fori_loop(0, T, bt_body, (best_tag, path0))
    return path_score, path, start_tag, feats


def bilstm_crf_forward(sentence, params):
    out = _forward_device(sentence, params)
    out = jax.block_until_ready(out)
    path_score, path, start_tag, feats = jax.device_get(out)   # single host sync
    assert int(start_tag) == START_IDX
    return float(path_score), [int(t) for t in path], np.asarray(feats)


# ---------------- pure numpy reference (for correctness check) ----------------
def _sigmoid(x):
    return 1.0 / (1.0 + np.exp(-x))


def _lstm_dir_ref(x_seq, w_ih, w_hh, b_ih, b_hh, reverse):
    T = x_seq.shape[0]
    H = w_hh.shape[1]
    h = np.zeros((H,), np.float32)
    c = np.zeros((H,), np.float32)
    out = np.zeros((T, H), np.float32)
    order = range(T - 1, -1, -1) if reverse else range(T)
    for t in order:
        gates = w_ih @ x_seq[t] + b_ih + w_hh @ h + b_hh
        i = _sigmoid(gates[0:H]); f = _sigmoid(gates[H:2 * H])
        g = np.tanh(gates[2 * H:3 * H]); o = _sigmoid(gates[3 * H:4 * H])
        c = f * c + i * g
        h = o * np.tanh(c)
        out[t] = h
    return out


def reference_forward(sentence, p):
    x_seq = p['emb'][sentence]
    of = _lstm_dir_ref(x_seq, p['w_ih_f'], p['w_hh_f'], p['b_ih_f'], p['b_hh_f'], False)
    ob = _lstm_dir_ref(x_seq, p['w_ih_b'], p['w_hh_b'], p['b_ih_b'], p['b_hh_b'], True)
    lstm_out = np.concatenate([of, ob], axis=1)
    feats = lstm_out @ p['h2t_w'].T + p['h2t_b']
    trans = p['trans']
    fv = np.full((TAGS,), -10000.0, np.float32)
    fv[START_IDX] = 0.0
    bptrs = []
    for t in range(feats.shape[0]):
        bp, vv = [], []
        for j in range(TAGS):
            ntv = fv + trans[j]
            b = int(np.argmax(ntv))
            bp.append(b)
            vv.append(ntv[b])
        fv = np.array(vv, np.float32) + feats[t]
        bptrs.append(bp)
    term = fv + trans[STOP_IDX]
    best = int(np.argmax(term))
    score = float(term[best])
    path = [best]
    for bp in reversed(bptrs):
        best = bp[best]
        path.append(best)
    start = path.pop()
    assert start == START_IDX
    path.reverse()
    return score, path, feats


if __name__ == "__main__":
    V, E, HIDDEN_DIM, T = 20, 16, 32, 8
    H = HIDDEN_DIM // 2
    key = jax.random.PRNGKey(0)
    ks = jax.random.split(key, 13)
    s = 0.1
    params = {
        'emb':    jax.random.normal(ks[0], (V, E), jnp.float32),
        'w_ih_f': s * jax.random.normal(ks[1], (4 * H, E), jnp.float32),
        'w_hh_f': s * jax.random.normal(ks[2], (4 * H, H), jnp.float32),
        'b_ih_f': s * jax.random.normal(ks[3], (4 * H,), jnp.float32),
        'b_hh_f': s * jax.random.normal(ks[4], (4 * H,), jnp.float32),
        'w_ih_b': s * jax.random.normal(ks[5], (4 * H, E), jnp.float32),
        'w_hh_b': s * jax.random.normal(ks[6], (4 * H, H), jnp.float32),
        'b_ih_b': s * jax.random.normal(ks[7], (4 * H,), jnp.float32),
        'b_hh_b': s * jax.random.normal(ks[8], (4 * H,), jnp.float32),
        'h2t_w':  s * jax.random.normal(ks[9], (TAGS, HIDDEN_DIM), jnp.float32),
        'h2t_b':  s * jax.random.normal(ks[10], (TAGS,), jnp.float32),
        'trans':  jax.random.normal(ks[11], (TAGS, TAGS), jnp.float32),
    }
    sentence = jax.random.randint(ks[12], (T,), 0, V, dtype=jnp.int32)

    score, path, feats = bilstm_crf_forward(sentence, params)

    p_np = {k: np.asarray(v) for k, v in params.items()}
    ref_score, ref_path, ref_feats = reference_forward(np.asarray(sentence), p_np)
    assert np.allclose(feats, ref_feats, atol=5e-3, rtol=5e-3)
    assert abs(score - ref_score) < 5e-3
    assert path == ref_path
    print("KERNEL_OK")
</pallas_src>

<mosaic_0001>
module attributes {stable_mosaic.version = 11 : i64} {
  func.func @_bilstm_crf_kernel(%arg0: memref<8x32xf32, #tpu.memory_space<vmem>>, %arg1: memref<32x128xf32, #tpu.memory_space<vmem>>, %arg2: memref<32x128xf32, #tpu.memory_space<vmem>>, %arg3: memref<1x128xf32, #tpu.memory_space<vmem>>, %arg4: memref<32x5xf32, #tpu.memory_space<vmem>>, %arg5: memref<1x5xf32, #tpu.memory_space<vmem>>, %arg6: memref<5x5xf32, #tpu.memory_space<vmem>>, %arg7: memref<1x5xf32, #tpu.memory_space<vmem>>, %arg8: memref<8x5xf32, #tpu.memory_space<vmem>>, %arg9: memref<5x8xi32, #tpu.memory_space<vmem>>, %arg10: memref<1x5xf32, #tpu.memory_space<vmem>>, %arg11: memref<8x128xf32, #tpu.memory_space<vmem>>, %arg12: memref<8x32xf32, #tpu.memory_space<vmem>>) attributes {dimension_semantics = [], scalar_prefetch = 0 : i64, scratch_operands = 2 : i64, tpu.core_type = #tpu.core_type<tc>} {
    %c0 = arith.constant 0 : index
    %c0_0 = arith.constant 0 : index
    %0 = vector.load %arg0[%c0, %c0_0] : memref<8x32xf32, #tpu.memory_space<vmem>>, vector<8x32xf32>
    %c0_1 = arith.constant 0 : index
    %c0_2 = arith.constant 0 : index
    %1 = vector.load %arg1[%c0_1, %c0_2] : memref<32x128xf32, #tpu.memory_space<vmem>>, vector<32x128xf32>
    %cst = arith.constant dense<0.000000e+00> : vector<8x128xf32>
    %2 = tpu.matmul %0, %1, %cst {dimension_numbers = #tpu.dot_dimension_numbers<[1], [0], [0], [1], [0, 0, 1, 1], [], []>} : vector<8x32xf32>, vector<32x128xf32>, vector<8x128xf32> -> vector<8x128xf32>
    %c0_3 = arith.constant 0 : index
    %c0_4 = arith.constant 0 : index
    %3 = vector.load %arg3[%c0_3, %c0_4] : memref<1x128xf32, #tpu.memory_space<vmem>>, vector<1x128xf32>
    %4 = vector.broadcast %3 : vector<1x128xf32> to vector<8x128xf32>
    %5 = arith.addf %2, %4 : vector<8x128xf32>
    %c0_5 = arith.constant 0 : index
    %c0_6 = arith.constant 0 : index
    %6 = vector.load %arg11[%c0_5, %c0_6] : memref<8x128xf32, #tpu.memory_space<vmem>>, vector<8x128xf32>
    tpu.vector_store %arg11[%c0_5, %c0_6], %5 {strides = array<i32>} : memref<8x128xf32, #tpu.memory_space<vmem>>, vector<8x128xf32>,
    %c0_7 = arith.constant 0 : index
    %c0_8 = arith.constant 0 : index
    %7 = vector.load %arg2[%c0_7, %c0_8] : memref<32x128xf32, #tpu.memory_space<vmem>>, vector<32x128xf32>
    %cst_9 = arith.constant 0.000000e+00 : f32
    %8 = vector.broadcast %cst_9 : f32 to vector<1x32xf32>
    %cst_10 = arith.constant 0.000000e+00 : f32
    %9 = vector.broadcast %cst_10 : f32 to vector<1x32xf32>
    %c0_i32 = arith.constant 0 : i32
    %10 = arith.index_cast %c0_i32 : i32 to index
    %c0_11 = arith.constant 0 : index
    %11 = vector.load %arg11[%10, %c0_11] : memref<8x128xf32, #tpu.memory_space<vmem>>, vector<1x128xf32>
    %cst_12 = arith.constant dense<0.000000e+00> : vector<1x128xf32>
    %12 = tpu.matmul %8, %7, %cst_12 {dimension_numbers = #tpu.dot_dimension_numbers<[1], [0], [0], [1], [0, 0, 1, 1], [], []>} : vector<1x32xf32>, vector<32x128xf32>, vector<1x128xf32> -> vector<1x128xf32>
    %13 = arith.addf %11, %12 : vector<1x128xf32>
    %14 = vector.extract_strided_slice %13 {offsets = [0, 0], sizes = [1, 96], strides = [1, 1]} : vector<1x128xf32> to vector<1x96xf32>
    %15 = arith.negf %14 : vector<1x96xf32>
    %16 = math.exp %15 : vector<1x96xf32>
    %cst_13 = arith.constant 1.000000e+00 : f32
    %17 = vector.broadcast %cst_13 : f32 to vector<1x96xf32>
    %18 = arith.addf %17, %16 : vector<1x96xf32>
    %19 = arith.divf %17, %18 : vector<1x96xf32>
    %20 = vector.extract_strided_slice %13 {offsets = [0, 96], sizes = [1, 32], strides = [1, 1]} : vector<1x128xf32> to vector<1x32xf32>
    %21 = math.tanh %20 : vector<1x32xf32>
    %22 = vector.extract_strided_slice %19 {offsets = [0, 0], sizes = [1, 32], strides = [1, 1]} : vector<1x96xf32> to vector<1x32xf32>
    %23 = vector.extract_strided_slice %19 {offsets = [0, 32], sizes = [1, 32], strides = [1, 1]} : vector<1x96xf32> to vector<1x32xf32>
    %24 = vector.extract_strided_slice %19 {offsets = [0, 64], sizes = [1, 32], strides = [1, 1]} : vector<1x96xf32> to vector<1x32xf32>
    %25 = arith.mulf %23, %9 : vector<1x32xf32>
    %26 = arith.mulf %22, %21 : vector<1x32xf32>
    %27 = arith.addf %25, %26 : vector<1x32xf32>
    %28 = math.tanh %27 : vector<1x32xf32>
    %29 = arith.mulf %24, %28 : vector<1x32xf32>
    %30 = vector.extract_strided_slice %29 {offsets = [0, 0], sizes = [1, 16], strides = [1, 1]} : vector<1x32xf32> to vector<1x16xf32>
    %31 = arith.index_cast %c0_i32 : i32 to index
    %c0_14 = arith.constant 0 : index
    %32 = vector.load %arg12[%31, %c0_14] : memref<8x32xf32, #tpu.memory_space<vmem>>, vector<1x16xf32>
    tpu.vector_store %arg12[%31, %c0_14], %30 {strides = array<i32>} : memref<8x32xf32, #tpu.memory_space<vmem>>, vector<1x16xf32>,
    %33 = vector.extract_strided_slice %29 {offsets = [0, 16], sizes = [1, 16], strides = [1, 1]} : vector<1x32xf32> to vector<1x16xf32>
    %c7_i32 = arith.constant 7 : i32
    %34 = arith.subi %c7_i32, %c0_i32 : i32
    %35 = arith.index_cast %34 : i32 to index
    %c16 = arith.constant 16 : index
    %36 = vector.load %arg12[%35, %c16] : memref<8x32xf32, #tpu.memory_space<vmem>>, vector<1x16xf32>
    tpu.vector_store %arg12[%35, %c16], %33 {strides = array<i32>} : memref<8x32xf32, #tpu.memory_space<vmem>>, vector<1x16xf32>,
    %c1_i32 = arith.constant 1 : i32
    %37 = arith.index_cast %c1_i32 : i32 to index
    %c0_15 = arith.constant 0 : index
    %38 = vector.load %arg11[%37, %c0_15] : memref<8x128xf32, #tpu.memory_space<vmem>>, vector<1x128xf32>
    %cst_16 = arith.constant dense<0.000000e+00> : vector<1x128xf32>
    %39 = tpu.matmul %29, %7, %cst_16 {dimension_numbers = #tpu.dot_dimension_numbers<[1], [0], [0], [1], [0, 0, 1, 1], [], []>} : vector<1x32xf32>, vector<32x128xf32>, vector<1x128xf32> -> vector<1x128xf32>
    %40 = arith.addf %38, %39 : vector<1x128xf32>
    %41 = vector.extract_strided_slice %40 {offsets = [0, 0], sizes = [1, 96], strides = [1, 1]} : vector<1x128xf32> to vector<1x96xf32>
    %42 = arith.negf %41 : vector<1x96xf32>
    %43 = math.exp %42 : vector<1x96xf32>
    %cst_17 = arith.constant 1.000000e+00 : f32
    %44 = vector.broadcast %cst_17 : f32 to vector<1x96xf32>
    %45 = arith.addf %44, %43 : vector<1x96xf32>
    %46 = arith.divf %44, %45 : vector<1x96xf32>
    %47 = vector.extract_strided_slice %40 {offsets = [0, 96], sizes = [1, 32], strides = [1, 1]} : vector<1x128xf32> to vector<1x32xf32>
    %48 = math.tanh %47 : vector<1x32xf32>
    %49 = vector.extract_strided_slice %46 {offsets = [0, 0], sizes = [1, 32], strides = [1, 1]} : vector<1x96xf32> to vector<1x32xf32>
    %50 = vector.extract_strided_slice %46 {offsets = [0, 32], sizes = [1, 32], strides = [1, 1]} : vector<1x96xf32> to vector<1x32xf32>
    %51 = vector.extract_strided_slice %46 {offsets = [0, 64], sizes = [1, 32], strides = [1, 1]} : vector<1x96xf32> to vector<1x32xf32>
    %52 = arith.mulf %50, %27 : vector<1x32xf32>
    %53 = arith.mulf %49, %48 : vector<1x32xf32>
    %54 = arith.addf %52, %53 : vector<1x32xf32>
    %55 = math.tanh %54 : vector<1x32xf32>
    %56 = arith.mulf %51, %55 : vector<1x32xf32>
    %57 = vector.extract_strided_slice %56 {offsets = [0, 0], sizes = [1, 16], strides = [1, 1]} : vector<1x32xf32> to vector<1x16xf32>
    %58 = arith.index_cast %c1_i32 : i32 to index
    %c0_18 = arith.constant 0 : index
    %59 = vector.load %arg12[%58, %c0_18] : memref<8x32xf32, #tpu.memory_space<vmem>>, vector<1x16xf32>
    tpu.vector_store %arg12[%58, %c0_18], %57 {strides = array<i32>} : memref<8x32xf32, #tpu.memory_space<vmem>>, vector<1x16xf32>,
    %60 = vector.extract_strided_slice %56 {offsets = [0, 16], sizes = [1, 16], strides = [1, 1]} : vector<1x32xf32> to vector<1x16xf32>
    %c7_i32_19 = arith.constant 7 : i32
    %61 = arith.subi %c7_i32_19, %c1_i32 : i32
    %62 = arith.index_cast %61 : i32 to index
    %c16_20 = arith.constant 16 : index
    %63 = vector.load %arg12[%62, %c16_20] : memref<8x32xf32, #tpu.memory_space<vmem>>, vector<1x16xf32>
    tpu.vector_store %arg12[%62, %c16_20], %60 {strides = array<i32>} : memref<8x32xf32, #tpu.memory_space<vmem>>, vector<1x16xf32>,
    %c2_i32 = arith.constant 2 : i32
    %64 = arith.index_cast %c2_i32 : i32 to index
    %c0_21 = arith.constant 0 : index
    %65 = vector.load %arg11[%64, %c0_21] : memref<8x128xf32, #tpu.memory_space<vmem>>, vector<1x128xf32>
    %cst_22 = arith.constant dense<0.000000e+00> : vector<1x128xf32>
    %66 = tpu.matmul %56, %7, %cst_22 {dimension_numbers = #tpu.dot_dimension_numbers<[1], [0], [0], [1], [0, 0, 1, 1], [], []>} : vector<1x32xf32>, vector<32x128xf32>, vector<1x128xf32> -> vector<1x128xf32>
    %67 = arith.addf %65, %66 : vector<1x128xf32>
    %68 = vector.extract_strided_slice %67 {offsets = [0, 0], sizes = [1, 96], strides = [1, 1]} : vector<1x128xf32> to vector<1x96xf32>
    %69 = arith.negf %68 : vector<1x96xf32>
    %70 = math.exp %69 : vector<1x96xf32>
    %cst_23 = arith.constant 1.000000e+00 : f32
    %71 = vector.broadcast %cst_23 : f32 to vector<1x96xf32>
    %72 = arith.addf %71, %70 : vector<1x96xf32>
    %73 = arith.divf %71, %72 : vector<1x96xf32>
    %74 = vector.extract_strided_slice %67 {offsets = [0, 96], sizes = [1, 32], strides = [1, 1]} : vector<1x128xf32> to vector<1x32xf32>
    %75 = math.tanh %74 : vector<1x32xf32>
    %76 = vector.extract_strided_slice %73 {offsets = [0, 0], sizes = [1, 32], strides = [1, 1]} : vector<1x96xf32> to vector<1x32xf32>
    %77 = vector.extract_strided_slice %73 {offsets = [0, 32], sizes = [1, 32], strides = [1, 1]} : vector<1x96xf32> to vector<1x32xf32>
    %78 = vector.extract_strided_slice %73 {offsets = [0, 64], sizes = [1, 32], strides = [1, 1]} : vector<1x96xf32> to vector<1x32xf32>
    %79 = arith.mulf %77, %54 : vector<1x32xf32>
    %80 = arith.mulf %76, %75 : vector<1x32xf32>
    %81 = arith.addf %79, %80 : vector<1x32xf32>
    %82 = math.tanh %81 : vector<1x32xf32>
    %83 = arith.mulf %78, %82 : vector<1x32xf32>
    %84 = vector.extract_strided_slice %83 {offsets = [0, 0], sizes = [1, 16], strides = [1, 1]} : vector<1x32xf32> to vector<1x16xf32>
    %85 = arith.index_cast %c2_i32 : i32 to index
    %c0_24 = arith.constant 0 : index
    %86 = vector.load %arg12[%85, %c0_24] : memref<8x32xf32, #tpu.memory_space<vmem>>, vector<1x16xf32>
    tpu.vector_store %arg12[%85, %c0_24], %84 {strides = array<i32>} : memref<8x32xf32, #tpu.memory_space<vmem>>, vector<1x16xf32>,
    %87 = vector.extract_strided_slice %83 {offsets = [0, 16], sizes = [1, 16], strides = [1, 1]} : vector<1x32xf32> to vector<1x16xf32>
    %c7_i32_25 = arith.constant 7 : i32
    %88 = arith.subi %c7_i32_25, %c2_i32 : i32
    %89 = arith.index_cast %88 : i32 to index
    %c16_26 = arith.constant 16 : index
    %90 = vector.load %arg12[%89, %c16_26] : memref<8x32xf32, #tpu.memory_space<vmem>>, vector<1x16xf32>
    tpu.vector_store %arg12[%89, %c16_26], %87 {strides = array<i32>} : memref<8x32xf32, #tpu.memory_space<vmem>>, vector<1x16xf32>,
    %c3_i32 = arith.constant 3 : i32
    %91 = arith.index_cast %c3_i32 : i32 to index
    %c0_27 = arith.constant 0 : index
    %92 = vector.load %arg11[%91, %c0_27] : memref<8x128xf32, #tpu.memory_space<vmem>>, vector<1x128xf32>
    %cst_28 = arith.constant dense<0.000000e+00> : vector<1x128xf32>
    %93 = tpu.matmul %83, %7, %cst_28 {dimension_numbers = #tpu.dot_dimension_numbers<[1], [0], [0], [1], [0, 0, 1, 1], [], []>} : vector<1x32xf32>, vector<32x128xf32>, vector<1x128xf32> -> vector<1x128xf32>
    %94 = arith.addf %92, %93 : vector<1x128xf32>
    %95 = vector.extract_strided_slice %94 {offsets = [0, 0], sizes = [1, 96], strides = [1, 1]} : vector<1x128xf32> to vector<1x96xf32>
    %96 = arith.negf %95 : vector<1x96xf32>
    %97 = math.exp %96 : vector<1x96xf32>
    %cst_29 = arith.constant 1.000000e+00 : f32
    %98 = vector.broadcast %cst_29 : f32 to vector<1x96xf32>
    %99 = arith.addf %98, %97 : vector<1x96xf32>
    %100 = arith.divf %98, %99 : vector<1x96xf32>
    %101 = vector.extract_strided_slice %94 {offsets = [0, 96], sizes = [1, 32], strides = [1, 1]} : vector<1x128xf32> to vector<1x32xf32>
    %102 = math.tanh %101 : vector<1x32xf32>
    %103 = vector.extract_strided_slice %100 {offsets = [0, 0], sizes = [1, 32], strides = [1, 1]} : vector<1x96xf32> to vector<1x32xf32>
    %104 = vector.extract_strided_slice %100 {offsets = [0, 32], sizes = [1, 32], strides = [1, 1]} : vector<1x96xf32> to vector<1x32xf32>
    %105 = vector.extract_strided_slice %100 {offsets = [0, 64], sizes = [1, 32], strides = [1, 1]} : vector<1x96xf32> to vector<1x32xf32>
    %106 = arith.mulf %104, %81 : vector<1x32xf32>
    %107 = arith.mulf %103, %102 : vector<1x32xf32>
    %108 = arith.addf %106, %107 : vector<1x32xf32>
    %109 = math.tanh %108 : vector<1x32xf32>
    %110 = arith.mulf %105, %109 : vector<1x32xf32>
    %111 = vector.extract_strided_slice %110 {offsets = [0, 0], sizes = [1, 16], strides = [1, 1]} : vector<1x32xf32> to vector<1x16xf32>
    %112 = arith.index_cast %c3_i32 : i32 to index
    %c0_30 = arith.constant 0 : index
    %113 = vector.load %arg12[%112, %c0_30] : memref<8x32xf32, #tpu.memory_space<vmem>>, vector<1x16xf32>
    tpu.vector_store %arg12[%112, %c0_30], %111 {strides = array<i32>} : memref<8x32xf32, #tpu.memory_space<vmem>>, vector<1x16xf32>,
    %114 = vector.extract_strided_slice %110 {offsets = [0, 16], sizes = [1, 16], strides = [1, 1]} : vector<1x32xf32> to vector<1x16xf32>
    %c7_i32_31 = arith.constant 7 : i32
    %115 = arith.subi %c7_i32_31, %c3_i32 : i32
    %116 = arith.index_cast %115 : i32 to index
    %c16_32 = arith.constant 16 : index
    %117 = vector.load %arg12[%116, %c16_32] : memref<8x32xf32, #tpu.memory_space<vmem>>, vector<1x16xf32>
    tpu.vector_store %arg12[%116, %c16_32], %114 {strides = array<i32>} : memref<8x32xf32, #tpu.memory_space<vmem>>, vector<1x16xf32>,
    %c4_i32 = arith.constant 4 : i32
    %118 = arith.index_cast %c4_i32 : i32 to index
    %c0_33 = arith.constant 0 : index
    %119 = vector.load %arg11[%118, %c0_33] : memref<8x128xf32, #tpu.memory_space<vmem>>, vector<1x128xf32>
    %cst_34 = arith.constant dense<0.000000e+00> : vector<1x128xf32>
    %120 = tpu.matmul %110, %7, %cst_34 {dimension_numbers = #tpu.dot_dimension_numbers<[1], [0], [0], [1], [0, 0, 1, 1], [], []>} : vector<1x32xf32>, vector<32x128xf32>, vector<1x128xf32> -> vector<1x128xf32>
    %121 = arith.addf %119, %120 : vector<1x128xf32>
    %122 = vector.extract_strided_slice %121 {offsets = [0, 0], sizes = [1, 96], strides = [1, 1]} : vector<1x128xf32> to vector<1x96xf32>
    %123 = arith.negf %122 : vector<1x96xf32>
    %124 = math.exp %123 : vector<1x96xf32>
    %cst_35 = arith.constant 1.000000e+00 : f32
    %125 = vector.broadcast %cst_35 : f32 to vector<1x96xf32>
    %126 = arith.addf %125, %124 : vector<1x96xf32>
    %127 = arith.divf %125, %126 : vector<1x96xf32>
    %128 = vector.extract_strided_slice %121 {offsets = [0, 96], sizes = [1, 32], strides = [1, 1]} : vector<1x128xf32> to vector<1x32xf32>
    %129 = math.tanh %128 : vector<1x32xf32>
    %130 = vector.extract_strided_slice %127 {offsets = [0, 0], sizes = [1, 32], strides = [1, 1]} : vector<1x96xf32> to vector<1x32xf32>
    %131 = vector.extract_strided_slice %127 {offsets = [0, 32], sizes = [1, 32], strides = [1, 1]} : vector<1x96xf32> to vector<1x32xf32>
    %132 = vector.extract_strided_slice %127 {offsets = [0, 64], sizes = [1, 32], strides = [1, 1]} : vector<1x96xf32> to vector<1x32xf32>
    %133 = arith.mulf %131, %108 : vector<1x32xf32>
    %134 = arith.mulf %130, %129 : vector<1x32xf32>
    %135 = arith.addf %133, %134 : vector<1x32xf32>
    %136 = math.tanh %135 : vector<1x32xf32>
    %137 = arith.mulf %132, %136 : vector<1x32xf32>
    %138 = vector.extract_strided_slice %137 {offsets = [0, 0], sizes = [1, 16], strides = [1, 1]} : vector<1x32xf32> to vector<1x16xf32>
    %139 = arith.index_cast %c4_i32 : i32 to index
    %c0_36 = arith.constant 0 : index
    %140 = vector.load %arg12[%139, %c0_36] : memref<8x32xf32, #tpu.memory_space<vmem>>, vector<1x16xf32>
    tpu.vector_store %arg12[%139, %c0_36], %138 {strides = array<i32>} : memref<8x32xf32, #tpu.memory_space<vmem>>, vector<1x16xf32>,
    %141 = vector.extract_strided_slice %137 {offsets = [0, 16], sizes = [1, 16], strides = [1, 1]} : vector<1x32xf32> to vector<1x16xf32>
    %c7_i32_37 = arith.constant 7 : i32
    %142 = arith.subi %c7_i32_37, %c4_i32 : i32
    %143 = arith.index_cast %142 : i32 to index
    %c16_38 = arith.constant 16 : index
    %144 = vector.load %arg12[%143, %c16_38] : memref<8x32xf32, #tpu.memory_space<vmem>>, vector<1x16xf32>
    tpu.vector_store %arg12[%143, %c16_38], %141 {strides = array<i32>} : memref<8x32xf32, #tpu.memory_space<vmem>>, vector<1x16xf32>,
    %c5_i32 = arith.constant 5 : i32
    %145 = arith.index_cast %c5_i32 : i32 to index
    %c0_39 = arith.constant 0 : index
    %146 = vector.load %arg11[%145, %c0_39] : memref<8x128xf32, #tpu.memory_space<vmem>>, vector<1x128xf32>
    %cst_40 = arith.constant dense<0.000000e+00> : vector<1x128xf32>
    %147 = tpu.matmul %137, %7, %cst_40 {dimension_numbers = #tpu.dot_dimension_numbers<[1], [0], [0], [1], [0, 0, 1, 1], [], []>} : vector<1x32xf32>, vector<32x128xf32>, vector<1x128xf32> -> vector<1x128xf32>
    %148 = arith.addf %146, %147 : vector<1x128xf32>
    %149 = vector.extract_strided_slice %148 {offsets = [0, 0], sizes = [1, 96], strides = [1, 1]} : vector<1x128xf32> to vector<1x96xf32>
    %150 = arith.negf %149 : vector<1x96xf32>
    %151 = math.exp %150 : vector<1x96xf32>
    %cst_41 = arith.constant 1.000000e+00 : f32
    %152 = vector.broadcast %cst_41 : f32 to vector<1x96xf32>
    %153 = arith.addf %152, %151 : vector<1x96xf32>
    %154 = arith.divf %152, %153 : vector<1x96xf32>
    %155 = vector.extract_strided_slice %148 {offsets = [0, 96], sizes = [1, 32], strides = [1, 1]} : vector<1x128xf32> to vector<1x32xf32>
    %156 = math.tanh %155 : vector<1x32xf32>
    %157 = vector.extract_strided_slice %154 {offsets = [0, 0], sizes = [1, 32], strides = [1, 1]} : vector<1x96xf32> to vector<1x32xf32>
    %158 = vector.extract_strided_slice %154 {offsets = [0, 32], sizes = [1, 32], strides = [1, 1]} : vector<1x96xf32> to vector<1x32xf32>
    %159 = vector.extract_strided_slice %154 {offsets = [0, 64], sizes = [1, 32], strides = [1, 1]} : vector<1x96xf32> to vector<1x32xf32>
    %160 = arith.mulf %158, %135 : vector<1x32xf32>
    %161 = arith.mulf %157, %156 : vector<1x32xf32>
    %162 = arith.addf %160, %161 : vector<1x32xf32>
    %163 = math.tanh %162 : vector<1x32xf32>
    %164 = arith.mulf %159, %163 : vector<1x32xf32>
    %165 = vector.extract_strided_slice %164 {offsets = [0, 0], sizes = [1, 16], strides = [1, 1]} : vector<1x32xf32> to vector<1x16xf32>
    %166 = arith.index_cast %c5_i32 : i32 to index
    %c0_42 = arith.constant 0 : index
    %167 = vector.load %arg12[%166, %c0_42] : memref<8x32xf32, #tpu.memory_space<vmem>>, vector<1x16xf32>
    tpu.vector_store %arg12[%166, %c0_42], %165 {strides = array<i32>} : memref<8x32xf32, #tpu.memory_space<vmem>>, vector<1x16xf32>,
    %168 = vector.extract_strided_slice %164 {offsets = [0, 16], sizes = [1, 16], strides = [1, 1]} : vector<1x32xf32> to vector<1x16xf32>
    %c7_i32_43 = arith.constant 7 : i32
    %169 = arith.subi %c7_i32_43, %c5_i32 : i32
    %170 = arith.index_cast %169 : i32 to index
    %c16_44 = arith.constant 16 : index
    %171 = vector.load %arg12[%170, %c16_44] : memref<8x32xf32, #tpu.memory_space<vmem>>, vector<1x16xf32>
    tpu.vector_store %arg12[%170, %c16_44], %168 {strides = array<i32>} : memref<8x32xf32, #tpu.memory_space<vmem>>, vector<1x16xf32>,
    %c6_i32 = arith.constant 6 : i32
    %172 = arith.index_cast %c6_i32 : i32 to index
    %c0_45 = arith.constant 0 : index
    %173 = vector.load %arg11[%172, %c0_45] : memref<8x128xf32, #tpu.memory_space<vmem>>, vector<1x128xf32>
    %cst_46 = arith.constant dense<0.000000e+00> : vector<1x128xf32>
    %174 = tpu.matmul %164, %7, %cst_46 {dimension_numbers = #tpu.dot_dimension_numbers<[1], [0], [0], [1], [0, 0, 1, 1], [], []>} : vector<1x32xf32>, vector<32x128xf32>, vector<1x128xf32> -> vector<1x128xf32>
    %175 = arith.addf %173, %174 : vector<1x128xf32>
    %176 = vector.extract_strided_slice %175 {offsets = [0, 0], sizes = [1, 96], strides = [1, 1]} : vector<1x128xf32> to vector<1x96xf32>
    %177 = arith.negf %176 : vector<1x96xf32>
    %178 = math.exp %177 : vector<1x96xf32>
    %cst_47 = arith.constant 1.000000e+00 : f32
    %179 = vector.broadcast %cst_47 : f32 to vector<1x96xf32>
    %180 = arith.addf %179, %178 : vector<1x96xf32>
    %181 = arith.divf %179, %180 : vector<1x96xf32>
    %182 = vector.extract_strided_slice %175 {offsets = [0, 96], sizes = [1, 32], strides = [1, 1]} : vector<1x128xf32> to vector<1x32xf32>
    %183 = math.tanh %182 : vector<1x32xf32>
    %184 = vector.extract_strided_slice %181 {offsets = [0, 0], sizes = [1, 32], strides = [1, 1]} : vector<1x96xf32> to vector<1x32xf32>
    %185 = vector.extract_strided_slice %181 {offsets = [0, 32], sizes = [1, 32], strides = [1, 1]} : vector<1x96xf32> to vector<1x32xf32>
    %186 = vector.extract_strided_slice %181 {offsets = [0, 64], sizes = [1, 32], strides = [1, 1]} : vector<1x96xf32> to vector<1x32xf32>
    %187 = arith.mulf %185, %162 : vector<1x32xf32>
    %188 = arith.mulf %184, %183 : vector<1x32xf32>
    %189 = arith.addf %187, %188 : vector<1x32xf32>
    %190 = math.tanh %189 : vector<1x32xf32>
    %191 = arith.mulf %186, %190 : vector<1x32xf32>
    %192 = vector.extract_strided_slice %191 {offsets = [0, 0], sizes = [1, 16], strides = [1, 1]} : vector<1x32xf32> to vector<1x16xf32>
    %193 = arith.index_cast %c6_i32 : i32 to index
    %c0_48 = arith.constant 0 : index
    %194 = vector.load %arg12[%193, %c0_48] : memref<8x32xf32, #tpu.memory_space<vmem>>, vector<1x16xf32>
    tpu.vector_store %arg12[%193, %c0_48], %192 {strides = array<i32>} : memref<8x32xf32, #tpu.memory_space<vmem>>, vector<1x16xf32>,
    %195 = vector.extract_strided_slice %191 {offsets = [0, 16], sizes = [1, 16], strides = [1, 1]} : vector<1x32xf32> to vector<1x16xf32>
    %c7_i32_49 = arith.constant 7 : i32
    %196 = arith.subi %c7_i32_49, %c6_i32 : i32
    %197 = arith.index_cast %196 : i32 to index
    %c16_50 = arith.constant 16 : index
    %198 = vector.load %arg12[%197, %c16_50] : memref<8x32xf32, #tpu.memory_space<vmem>>, vector<1x16xf32>
    tpu.vector_store %arg12[%197, %c16_50], %195 {strides = array<i32>} : memref<8x32xf32, #tpu.memory_space<vmem>>, vector<1x16xf32>,
    %c7_i32_51 = arith.constant 7 : i32
    %199 = arith.index_cast %c7_i32_51 : i32 to index
    %c0_52 = arith.constant 0 : index
    %200 = vector.load %arg11[%199, %c0_52] : memref<8x128xf32, #tpu.memory_space<vmem>>, vector<1x128xf32>
    %cst_53 = arith.constant dense<0.000000e+00> : vector<1x128xf32>
    %201 = tpu.matmul %191, %7, %cst_53 {dimension_numbers = #tpu.dot_dimension_numbers<[1], [0], [0], [1], [0, 0, 1, 1], [], []>} : vector<1x32xf32>, vector<32x128xf32>, vector<1x128xf32> -> vector<1x128xf32>
    %202 = arith.addf %200, %201 : vector<1x128xf32>
    %203 = vector.extract_strided_slice %202 {offsets = [0, 0], sizes = [1, 96], strides = [1, 1]} : vector<1x128xf32> to vector<1x96xf32>
    %204 = arith.negf %203 : vector<1x96xf32>
    %205 = math.exp %204 : vector<1x96xf32>
    %cst_54 = arith.constant 1.000000e+00 : f32
    %206 = vector.broadcast %cst_54 : f32 to vector<1x96xf32>
    %207 = arith.addf %206, %205 : vector<1x96xf32>
    %208 = arith.divf %206, %207 : vector<1x96xf32>
    %209 = vector.extract_strided_slice %202 {offsets = [0, 96], sizes = [1, 32], strides = [1, 1]} : vector<1x128xf32> to vector<1x32xf32>
    %210 = math.tanh %209 : vector<1x32xf32>
    %211 = vector.extract_strided_slice %208 {offsets = [0, 0], sizes = [1, 32], strides = [1, 1]} : vector<1x96xf32> to vector<1x32xf32>
    %212 = vector.extract_strided_slice %208 {offsets = [0, 32], sizes = [1, 32], strides = [1, 1]} : vector<1x96xf32> to vector<1x32xf32>
    %213 = vector.extract_strided_slice %208 {offsets = [0, 64], sizes = [1, 32], strides = [1, 1]} : vector<1x96xf32> to vector<1x32xf32>
    %214 = arith.mulf %212, %189 : vector<1x32xf32>
    %215 = arith.mulf %211, %210 : vector<1x32xf32>
    %216 = arith.addf %214, %215 : vector<1x32xf32>
    %217 = math.tanh %216 : vector<1x32xf32>
    %218 = arith.mulf %213, %217 : vector<1x32xf32>
    %219 = vector.extract_strided_slice %218 {offsets = [0, 0], sizes = [1, 16], strides = [1, 1]} : vector<1x32xf32> to vector<1x16xf32>
    %220 = arith.index_cast %c7_i32_51 : i32 to index
    %c0_55 = arith.constant 0 : index
    %221 = vector.load %arg12[%220, %c0_55] : memref<8x32xf32, #tpu.memory_space<vmem>>, vector<1x16xf32>
    tpu.vector_store %arg12[%220, %c0_55], %219 {strides = array<i32>} : memref<8x32xf32, #tpu.memory_space<vmem>>, vector<1x16xf32>,
    %222 = vector.extract_strided_slice %218 {offsets = [0, 16], sizes = [1, 16], strides = [1, 1]} : vector<1x32xf32> to vector<1x16xf32>
    %c7_i32_56 = arith.constant 7 : i32
    %223 = arith.subi %c7_i32_56, %c7_i32_51 : i32
    %224 = arith.index_cast %223 : i32 to index
    %c16_57 = arith.constant 16 : index
    %225 = vector.load %arg12[%224, %c16_57] : memref<8x32xf32, #tpu.memory_space<vmem>>, vector<1x16xf32>
    tpu.vector_store %arg12[%224, %c16_57], %222 {strides = array<i32>} : memref<8x32xf32, #tpu.memory_space<vmem>>, vector<1x16xf32>,
    %c8_i32 = arith.constant 8 : i32
    %c0_58 = arith.constant 0 : index
    %c0_59 = arith.constant 0 : index
    %226 = vector.load %arg12[%c0_58, %c0_59] : memref<8x32xf32, #tpu.memory_space<vmem>>, vector<8x32xf32>
    %c0_60 = arith.constant 0 : index
    %c0_61 = arith.constant 0 : index
    %227 = vector.load %arg4[%c0_60, %c0_61] : memref<32x5xf32, #tpu.memory_space<vmem>>, vector<32x5xf32>
    %cst_62 = arith.constant dense<0.000000e+00> : vector<8x5xf32>
    %228 = tpu.matmul %226, %227, %cst_62 {dimension_numbers = #tpu.dot_dimension_numbers<[1], [0], [0], [1], [0, 0, 1, 1], [], []>} : vector<8x32xf32>, vector<32x5xf32>, vector<8x5xf32> -> vector<8x5xf32>
    %c0_63 = arith.constant 0 : index
    %c0_64 = arith.constant 0 : index
    %229 = vector.load %arg5[%c0_63, %c0_64] : memref<1x5xf32, #tpu.memory_space<vmem>>, vector<1x5xf32>
    %230 = vector.broadcast %229 : vector<1x5xf32> to vector<8x5xf32>
    %231 = arith.addf %228, %230 : vector<8x5xf32>
    %c0_65 = arith.constant 0 : index
    %c0_66 = arith.constant 0 : index
    %232 = vector.load %arg8[%c0_65, %c0_66] : memref<8x5xf32, #tpu.memory_space<vmem>>, vector<8x5xf32>
    tpu.vector_store %arg8[%c0_65, %c0_66], %231 {strides = array<i32>} : memref<8x5xf32, #tpu.memory_space<vmem>>, vector<8x5xf32>,
    %c0_67 = arith.constant 0 : index
    %c0_68 = arith.constant 0 : index
    %233 = vector.load %arg6[%c0_67, %c0_68] : memref<5x5xf32, #tpu.memory_space<vmem>>, vector<5x5xf32>
    %234 = tpu.iota {dimensions = array<i32: 1>} : vector<5x5xi32>
    %235 = tpu.iota {dimensions = array<i32: 0>} : vector<5x5xi32>
    %236 = arith.cmpi eq, %235, %234 : vector<5x5xi32>
    %237 = tpu.iota {dimensions = array<i32: 1>} : vector<1x5xi32>
    %c3_i32_69 = arith.constant 3 : i32
    %238 = vector.broadcast %c3_i32_69 : i32 to vector<1x5xi32>
    %239 = arith.cmpi eq, %237, %238 : vector<1x5xi32>
    %cst_70 = arith.constant 0.000000e+00 : f32
    %cst_71 = arith.constant -1.000000e+04 : f32
    %240 = vector.broadcast %cst_70 : f32 to vector<1x5xf32>
    %241 = vector.broadcast %cst_71 : f32 to vector<1x5xf32>
    %242 = arith.select %239, %240, %241 : vector<1x5xi1>, vector<1x5xf32>
    %243 = vector.broadcast %242 : vector<1x5xf32> to vector<5x5xf32>
    %244 = arith.addf %243, %233 : vector<5x5xf32>
    %cst_72 = arith.constant dense<0xFF800000> : vector<5xf32>
    %245 = vector.multi_reduction <maximumf>, %244, %cst_72 [1] : vector<5x5xf32> to vector<5xf32>
    %246 = vector.shape_cast %245 : vector<5xf32> to vector<5x1xf32>
    %247 = vector.broadcast %246 : vector<5x1xf32> to vector<5x5xf32>
    %248 = arith.cmpf oeq, %244, %247 : vector<5x5xf32>
    %c5_i32_73 = arith.constant 5 : i32
    %249 = vector.broadcast %c5_i32_73 : i32 to vector<5x5xi32>
    %250 = arith.select %248, %234, %249 : vector<5x5xi1>, vector<5x5xi32>
    %cst_74 = arith.constant dense<2147483647> : vector<5xi32>
    %251 = vector.multi_reduction <minsi>, %250, %cst_74 [1] : vector<5x5xi32> to vector<5xi32>
    %252 = vector.shape_cast %251 : vector<5xi32> to vector<5x1xi32>
    %cst_75 = arith.constant 0.000000e+00 : f32
    %253 = vector.shape_cast %246 : vector<5x1xf32> to vector<5x1xf32>
    %254 = vector.broadcast %253 : vector<5x1xf32> to vector<5x5xf32>
    %255 = vector.broadcast %cst_75 : f32 to vector<5x5xf32>
    %256 = arith.select %236, %254, %255 : vector<5x5xi1>, vector<5x5xf32>
    %cst_76 = arith.constant dense<0.000000e+00> : vector<5xf32>
    %257 = vector.multi_reduction <add>, %256, %cst_76 [0] : vector<5x5xf32> to vector<5xf32>
    %258 = vector.shape_cast %257 : vector<5xf32> to vector<1x5xf32>
    %259 = vector.extract_strided_slice %231 {offsets = [0, 0], sizes = [1, 5], strides = [1, 1]} : vector<8x5xf32> to vector<1x5xf32>
    %260 = arith.addf %258, %259 : vector<1x5xf32>
    %261 = vector.broadcast %260 : vector<1x5xf32> to vector<5x5xf32>
    %262 = arith.addf %261, %233 : vector<5x5xf32>
    %cst_77 = arith.constant dense<0xFF800000> : vector<5xf32>
    %263 = vector.multi_reduction <maximumf>, %262, %cst_77 [1] : vector<5x5xf32> to vector<5xf32>
    %264 = vector.shape_cast %263 : vector<5xf32> to vector<5x1xf32>
    %265 = vector.broadcast %264 : vector<5x1xf32> to vector<5x5xf32>
    %266 = arith.cmpf oeq, %262, %265 : vector<5x5xf32>
    %c5_i32_78 = arith.constant 5 : i32
    %267 = vector.broadcast %c5_i32_78 : i32 to vector<5x5xi32>
    %268 = arith.select %266, %234, %267 : vector<5x5xi1>, vector<5x5xi32>
    %cst_79 = arith.constant dense<2147483647> : vector<5xi32>
    %269 = vector.multi_reduction <minsi>, %268, %cst_79 [1] : vector<5x5xi32> to vector<5xi32>
    %270 = vector.shape_cast %269 : vector<5xi32> to vector<5x1xi32>
    %cst_80 = arith.constant 0.000000e+00 : f32
    %271 = vector.shape_cast %264 : vector<5x1xf32> to vector<5x1xf32>
    %272 = vector.broadcast %271 : vector<5x1xf32> to vector<5x5xf32>
    %273 = vector.broadcast %cst_80 : f32 to vector<5x5xf32>
    %274 = arith.select %236, %272, %273 : vector<5x5xi1>, vector<5x5xf32>
    %cst_81 = arith.constant dense<0.000000e+00> : vector<5xf32>
    %275 = vector.multi_reduction <add>, %274, %cst_81 [0] : vector<5x5xf32> to vector<5xf32>
    %276 = vector.shape_cast %275 : vector<5xf32> to vector<1x5xf32>
    %277 = vector.extract_strided_slice %231 {offsets = [1, 0], sizes = [1, 5], strides = [1, 1]} : vector<8x5xf32> to vector<1x5xf32>
    %278 = arith.addf %276, %277 : vector<1x5xf32>
    %279 = vector.broadcast %278 : vector<1x5xf32> to vector<5x5xf32>
    %280 = arith.addf %279, %233 : vector<5x5xf32>
    %cst_82 = arith.constant dense<0xFF800000> : vector<5xf32>
    %281 = vector.multi_reduction <maximumf>, %280, %cst_82 [1] : vector<5x5xf32> to vector<5xf32>
    %282 = vector.shape_cast %281 : vector<5xf32> to vector<5x1xf32>
    %283 = vector.broadcast %282 : vector<5x1xf32> to vector<5x5xf32>
    %284 = arith.cmpf oeq, %280, %283 : vector<5x5xf32>
    %c5_i32_83 = arith.constant 5 : i32
    %285 = vector.broadcast %c5_i32_83 : i32 to vector<5x5xi32>
    %286 = arith.select %284, %234, %285 : vector<5x5xi1>, vector<5x5xi32>
    %cst_84 = arith.constant dense<2147483647> : vector<5xi32>
    %287 = vector.multi_reduction <minsi>, %286, %cst_84 [1] : vector<5x5xi32> to vector<5xi32>
    %288 = vector.shape_cast %287 : vector<5xi32> to vector<5x1xi32>
    %cst_85 = arith.constant 0.000000e+00 : f32
    %289 = vector.shape_cast %282 : vector<5x1xf32> to vector<5x1xf32>
    %290 = vector.broadcast %289 : vector<5x1xf32> to vector<5x5xf32>
    %291 = vector.broadcast %cst_85 : f32 to vector<5x5xf32>
    %292 = arith.select %236, %290, %291 : vector<5x5xi1>, vector<5x5xf32>
    %cst_86 = arith.constant dense<0.000000e+00> : vector<5xf32>
    %293 = vector.multi_reduction <add>, %292, %cst_86 [0] : vector<5x5xf32> to vector<5xf32>
    %294 = vector.shape_cast %293 : vector<5xf32> to vector<1x5xf32>
    %295 = vector.extract_strided_slice %231 {offsets = [2, 0], sizes = [1, 5], strides = [1, 1]} : vector<8x5xf32> to vector<1x5xf32>
    %296 = arith.addf %294, %295 : vector<1x5xf32>
    %297 = vector.broadcast %296 : vector<1x5xf32> to vector<5x5xf32>
    %298 = arith.addf %297, %233 : vector<5x5xf32>
    %cst_87 = arith.constant dense<0xFF800000> : vector<5xf32>
    %299 = vector.multi_reduction <maximumf>, %298, %cst_87 [1] : vector<5x5xf32> to vector<5xf32>
    %300 = vector.shape_cast %299 : vector<5xf32> to vector<5x1xf32>
    %301 = vector.broadcast %300 : vector<5x1xf32> to vector<5x5xf32>
    %302 = arith.cmpf oeq, %298, %301 : vector<5x5xf32>
    %c5_i32_88 = arith.constant 5 : i32
    %303 = vector.broadcast %c5_i32_88 : i32 to vector<5x5xi32>
    %304 = arith.select %302, %234, %303 : vector<5x5xi1>, vector<5x5xi32>
    %cst_89 = arith.constant dense<2147483647> : vector<5xi32>
    %305 = vector.multi_reduction <minsi>, %304, %cst_89 [1] : vector<5x5xi32> to vector<5xi32>
    %306 = vector.shape_cast %305 : vector<5xi32> to vector<5x1xi32>
    %cst_90 = arith.constant 0.000000e+00 : f32
    %307 = vector.shape_cast %300 : vector<5x1xf32> to vector<5x1xf32>
    %308 = vector.broadcast %307 : vector<5x1xf32> to vector<5x5xf32>
    %309 = vector.broadcast %cst_90 : f32 to vector<5x5xf32>
    %310 = arith.select %236, %308, %309 : vector<5x5xi1>, vector<5x5xf32>
    %cst_91 = arith.constant dense<0.000000e+00> : vector<5xf32>
    %311 = vector.multi_reduction <add>, %310, %cst_91 [0] : vector<5x5xf32> to vector<5xf32>
    %312 = vector.shape_cast %311 : vector<5xf32> to vector<1x5xf32>
    %313 = vector.extract_strided_slice %231 {offsets = [3, 0], sizes = [1, 5], strides = [1, 1]} : vector<8x5xf32> to vector<1x5xf32>
    %314 = arith.addf %312, %313 : vector<1x5xf32>
    %315 = vector.broadcast %314 : vector<1x5xf32> to vector<5x5xf32>
    %316 = arith.addf %315, %233 : vector<5x5xf32>
    %cst_92 = arith.constant dense<0xFF800000> : vector<5xf32>
    %317 = vector.multi_reduction <maximumf>, %316, %cst_92 [1] : vector<5x5xf32> to vector<5xf32>
    %318 = vector.shape_cast %317 : vector<5xf32> to vector<5x1xf32>
    %319 = vector.broadcast %318 : vector<5x1xf32> to vector<5x5xf32>
    %320 = arith.cmpf oeq, %316, %319 : vector<5x5xf32>
    %c5_i32_93 = arith.constant 5 : i32
    %321 = vector.broadcast %c5_i32_93 : i32 to vector<5x5xi32>
    %322 = arith.select %320, %234, %321 : vector<5x5xi1>, vector<5x5xi32>
    %cst_94 = arith.constant dense<2147483647> : vector<5xi32>
    %323 = vector.multi_reduction <minsi>, %322, %cst_94 [1] : vector<5x5xi32> to vector<5xi32>
    %324 = vector.shape_cast %323 : vector<5xi32> to vector<5x1xi32>
    %cst_95 = arith.constant 0.000000e+00 : f32
    %325 = vector.shape_cast %318 : vector<5x1xf32> to vector<5x1xf32>
    %326 = vector.broadcast %325 : vector<5x1xf32> to vector<5x5xf32>
    %327 = vector.broadcast %cst_95 : f32 to vector<5x5xf32>
    %328 = arith.select %236, %326, %327 : vector<5x5xi1>, vector<5x5xf32>
    %cst_96 = arith.constant dense<0.000000e+00> : vector<5xf32>
    %329 = vector.multi_reduction <add>, %328, %cst_96 [0] : vector<5x5xf32> to vector<5xf32>
    %330 = vector.shape_cast %329 : vector<5xf32> to vector<1x5xf32>
    %331 = vector.extract_strided_slice %231 {offsets = [4, 0], sizes = [1, 5], strides = [1, 1]} : vector<8x5xf32> to vector<1x5xf32>
    %332 = arith.addf %330, %331 : vector<1x5xf32>
    %333 = vector.broadcast %332 : vector<1x5xf32> to vector<5x5xf32>
    %334 = arith.addf %333, %233 : vector<5x5xf32>
    %cst_97 = arith.constant dense<0xFF800000> : vector<5xf32>
    %335 = vector.multi_reduction <maximumf>, %334, %cst_97 [1] : vector<5x5xf32> to vector<5xf32>
    %336 = vector.shape_cast %335 : vector<5xf32> to vector<5x1xf32>
    %337 = vector.broadcast %336 : vector<5x1xf32> to vector<5x5xf32>
    %338 = arith.cmpf oeq, %334, %337 : vector<5x5xf32>
    %c5_i32_98 = arith.constant 5 : i32
    %339 = vector.broadcast %c5_i32_98 : i32 to vector<5x5xi32>
    %340 = arith.select %338, %234, %339 : vector<5x5xi1>, vector<5x5xi32>
    %cst_99 = arith.constant dense<2147483647> : vector<5xi32>
    %341 = vector.multi_reduction <minsi>, %340, %cst_99 [1] : vector<5x5xi32> to vector<5xi32>
    %342 = vector.shape_cast %341 : vector<5xi32> to vector<5x1xi32>
    %cst_100 = arith.constant 0.000000e+00 : f32
    %343 = vector.shape_cast %336 : vector<5x1xf32> to vector<5x1xf32>
    %344 = vector.broadcast %343 : vector<5x1xf32> to vector<5x5xf32>
    %345 = vector.broadcast %cst_100 : f32 to vector<5x5xf32>
    %346 = arith.select %236, %344, %345 : vector<5x5xi1>, vector<5x5xf32>
    %cst_101 = arith.constant dense<0.000000e+00> : vector<5xf32>
    %347 = vector.multi_reduction <add>, %346, %cst_101 [0] : vector<5x5xf32> to vector<5xf32>
    %348 = vector.shape_cast %347 : vector<5xf32> to vector<1x5xf32>
    %349 = vector.extract_strided_slice %231 {offsets = [5, 0], sizes = [1, 5], strides = [1, 1]} : vector<8x5xf32> to vector<1x5xf32>
    %350 = arith.addf %348, %349 : vector<1x5xf32>
    %351 = vector.broadcast %350 : vector<1x5xf32> to vector<5x5xf32>
    %352 = arith.addf %351, %233 : vector<5x5xf32>
    %cst_102 = arith.constant dense<0xFF800000> : vector<5xf32>
    %353 = vector.multi_reduction <maximumf>, %352, %cst_102 [1] : vector<5x5xf32> to vector<5xf32>
    %354 = vector.shape_cast %353 : vector<5xf32> to vector<5x1xf32>
    %355 = vector.broadcast %354 : vector<5x1xf32> to vector<5x5xf32>
    %356 = arith.cmpf oeq, %352, %355 : vector<5x5xf32>
    %c5_i32_103 = arith.constant 5 : i32
    %357 = vector.broadcast %c5_i32_103 : i32 to vector<5x5xi32>
    %358 = arith.select %356, %234, %357 : vector<5x5xi1>, vector<5x5xi32>
    %cst_104 = arith.constant dense<2147483647> : vector<5xi32>
    %359 = vector.multi_reduction <minsi>, %358, %cst_104 [1] : vector<5x5xi32> to vector<5xi32>
    %360 = vector.shape_cast %359 : vector<5xi32> to vector<5x1xi32>
    %cst_105 = arith.constant 0.000000e+00 : f32
    %361 = vector.shape_cast %354 : vector<5x1xf32> to vector<5x1xf32>
    %362 = vector.broadcast %361 : vector<5x1xf32> to vector<5x5xf32>
    %363 = vector.broadcast %cst_105 : f32 to vector<5x5xf32>
    %364 = arith.select %236, %362, %363 : vector<5x5xi1>, vector<5x5xf32>
    %cst_106 = arith.constant dense<0.000000e+00> : vector<5xf32>
    %365 = vector.multi_reduction <add>, %364, %cst_106 [0] : vector<5x5xf32> to vector<5xf32>
    %366 = vector.shape_cast %365 : vector<5xf32> to vector<1x5xf32>
    %367 = vector.extract_strided_slice %231 {offsets = [6, 0], sizes = [1, 5], strides = [1, 1]} : vector<8x5xf32> to vector<1x5xf32>
    %368 = arith.addf %366, %367 : vector<1x5xf32>
    %369 = vector.broadcast %368 : vector<1x5xf32> to vector<5x5xf32>
    %370 = arith.addf %369, %233 : vector<5x5xf32>
    %cst_107 = arith.constant dense<0xFF800000> : vector<5xf32>
    %371 = vector.multi_reduction <maximumf>, %370, %cst_107 [1] : vector<5x5xf32> to vector<5xf32>
    %372 = vector.shape_cast %371 : vector<5xf32> to vector<5x1xf32>
    %373 = vector.broadcast %372 : vector<5x1xf32> to vector<5x5xf32>
    %374 = arith.cmpf oeq, %370, %373 : vector<5x5xf32>
    %c5_i32_108 = arith.constant 5 : i32
    %375 = vector.broadcast %c5_i32_108 : i32 to vector<5x5xi32>
    %376 = arith.select %374, %234, %375 : vector<5x5xi1>, vector<5x5xi32>
    %cst_109 = arith.constant dense<2147483647> : vector<5xi32>
    %377 = vector.multi_reduction <minsi>, %376, %cst_109 [1] : vector<5x5xi32> to vector<5xi32>
    %378 = vector.shape_cast %377 : vector<5xi32> to vector<5x1xi32>
    %cst_110 = arith.constant 0.000000e+00 : f32
    %379 = vector.shape_cast %372 : vector<5x1xf32> to vector<5x1xf32>
    %380 = vector.broadcast %379 : vector<5x1xf32> to vector<5x5xf32>
    %381 = vector.broadcast %cst_110 : f32 to vector<5x5xf32>
    %382 = arith.select %236, %380, %381 : vector<5x5xi1>, vector<5x5xf32>
    %cst_111 = arith.constant dense<0.000000e+00> : vector<5xf32>
    %383 = vector.multi_reduction <add>, %382, %cst_111 [0] : vector<5x5xf32> to vector<5xf32>
    %384 = vector.shape_cast %383 : vector<5xf32> to vector<1x5xf32>
    %385 = vector.extract_strided_slice %231 {offsets = [7, 0], sizes = [1, 5], strides = [1, 1]} : vector<8x5xf32> to vector<1x5xf32>
    %386 = arith.addf %384, %385 : vector<1x5xf32>
    %387 = tpu.concatenate %252, %270, %288, %306, %324, %342, %360, %378 in 1 : vector<5x1xi32>, vector<5x1xi32>, vector<5x1xi32>, vector<5x1xi32>, vector<5x1xi32>, vector<5x1xi32>, vector<5x1xi32>, vector<5x1xi32> -> vector<5x8xi32>
    %c0_112 = arith.constant 0 : index
    %c0_113 = arith.constant 0 : index
    %388 = vector.load %arg9[%c0_112, %c0_113] : memref<5x8xi32, #tpu.memory_space<vmem>>, vector<5x8xi32>
    tpu.vector_store %arg9[%c0_112, %c0_113], %387 {strides = array<i32>} : memref<5x8xi32, #tpu.memory_space<vmem>>, vector<5x8xi32>,
    %c0_114 = arith.constant 0 : index
    %c0_115 = arith.constant 0 : index
    %389 = vector.load %arg7[%c0_114, %c0_115] : memref<1x5xf32, #tpu.memory_space<vmem>>, vector<1x5xf32>
    %390 = arith.addf %386, %389 : vector<1x5xf32>
    %c0_116 = arith.constant 0 : index
    %c0_117 = arith.constant 0 : index
    %391 = vector.load %arg10[%c0_116, %c0_117] : memref<1x5xf32, #tpu.memory_space<vmem>>, vector<1x5xf32>
    tpu.vector_store %arg10[%c0_116, %c0_117], %390 {strides = array<i32>} : memref<1x5xf32, #tpu.memory_space<vmem>>, vector<1x5xf32>,
    return
  }
}

</mosaic_0001>

<llo_original>
// kernel: _forward_device.1
$region0: #{_forward_device.1}
  #allocation0 [shape = 'u32[]', space=smem, size = 0x4, offset = 0x4, fixed_abs, tag = 'smem constant byte address 0x4 - core index']
  #allocation1 [shape = 'u32[144,128]{1,0:T(1,128)}', space=vmem, size = 0x12000, scoped, tag = 'internal scratch']
  #allocation2 [shape = 'f32[8,128]{1,0:T(8,128)}', space=vmem, size = 0x1000, scoped, tag = 'scratch operand']
  #allocation3 [shape = 'f32[8,32]{1,0:T(8,128)}', space=vmem, size = 0x1000, scoped, tag = 'scratch operand']
  %s0 = inlined_call_operand.vmem [shape: f32[8,32], index: 0, kind: input, shape index: {}]
  %s1 = inlined_call_operand.vmem [shape: f32[32,128], index: 1, kind: input, shape index: {}]
  %s2 = inlined_call_operand.vmem [shape: f32[32,128], index: 2, kind: input, shape index: {}]
  %s3 = inlined_call_operand.vmem [shape: f32[1,128], index: 3, kind: input, shape index: {}]
  %s4 = inlined_call_operand.vmem [shape: f32[32,5], index: 4, kind: input, shape index: {}]
  %s5 = inlined_call_operand.vmem [shape: f32[1,5], index: 5, kind: input, shape index: {}]
  %s6 = inlined_call_operand.vmem [shape: f32[5,5], index: 6, kind: input, shape index: {}]
  %s7 = inlined_call_operand.vmem [shape: f32[1,5], index: 7, kind: input, shape index: {}]
  %s8 = inlined_call_operand.hbm [shape: f32[8,5], index: 8, kind: output, shape index: {0}]
  %s9 = inlined_call_operand.vmem [shape: s32[5,8], index: 9, kind: output, shape index: {1}]
  %s10 = inlined_call_operand.vmem [shape: f32[1,5], index: 10, kind: output, shape index: {2}]
  %11 = xla_tuple %s8, %s9, %s10
  %s12 = sld [smem:[#allocation0]]
  $region58: #{_forward_device.1} parent=0
    _
  %s14 = ssub.s32 1, %s12
  %s15 = scalar_select 0, %s14, %s12
  $region1: #{_forward_device.1} parent=0
    #allocation4 [shape = 'u8[4096]{0}', space=vmem, size = 0x1000, scoped, tag = 'output window, operand 0, single buffered']
    #allocation5 [shape = 's32[1]{0}', space=sflag, size = 0x4, scoped, tag = 'scoped memory for _forward_device.1']
    %16 = vsyncpa [#allocation5], 0
    // Predicated region
    $region2: #{_forward_device.1} parent=1 // pred_check
      _
    $region3: #{_forward_device.1} parent=1 // pred_check_branch
      %18 = sbr.rel (0) target = $region5
    $region4: #{_forward_device.1} parent=1 // pred_region
      _
    $region5: #{_forward_device.1} parent=1 // pred_fallthru
      _
    // Predicated region
    $region6: #{_forward_device.1} parent=1 // pred_check
      _
    $region7: #{_forward_device.1} parent=1 // pred_check_branch
      %20 = sbr.rel (0) target = $region9
    $region8: #{_forward_device.1} parent=1 // pred_region
      _
    $region9: #{_forward_device.1} parent=1 // pred_fallthru
      _
    // Predicated region
    $region10: #{_forward_device.1} parent=1 // pred_check
      _
    $region11: #{_forward_device.1} parent=1 // pred_check_branch
      %22 = sbr.rel (0) target = $region13
    $region12: #{_forward_device.1} parent=1 // pred_region
      _
    $region13: #{_forward_device.1} parent=1 // pred_fallthru
      _
    // Predicated region
    $region14: #{_forward_device.1} parent=1 // pred_check
      _
    $region15: #{_forward_device.1} parent=1 // pred_check_branch
      %24 = sbr.rel (0) target = $region17
    $region16: #{_forward_device.1} parent=1 // pred_region
      _
    $region17: #{_forward_device.1} parent=1 // pred_fallthru
      _
    // Predicated region
    $region18: #{_forward_device.1} parent=1 // pred_check
      _
    $region19: #{_forward_device.1} parent=1 // pred_check_branch
      %26 = sbr.rel (0) target = $region21
    $region20: #{_forward_device.1} parent=1 // pred_region
      _
    $region21: #{_forward_device.1} parent=1 // pred_fallthru
      _
    // Predicated region
    $region22: #{_forward_device.1} parent=1 // pred_check
      _
    $region23: #{_forward_device.1} parent=1 // pred_check_branch
      %28 = sbr.rel (0) target = $region25
    $region24: #{_forward_device.1} parent=1 // pred_region
      _
    $region25: #{_forward_device.1} parent=1 // pred_fallthru
      _
    // Predicated region
    $region26: #{_forward_device.1} parent=1 // pred_check
      _
    $region27: #{_forward_device.1} parent=1 // pred_check_branch
      %30 = sbr.rel (0) target = $region29
    $region28: #{_forward_device.1} parent=1 // pred_region
      _
    $region29: #{_forward_device.1} parent=1 // pred_fallthru
      _
    // Predicated region
    $region30: #{_forward_device.1} parent=1 // pred_check
      _
    $region31: #{_forward_device.1} parent=1 // pred_check_branch
      %32 = sbr.rel (0) target = $region33
    $region32: #{_forward_device.1} parent=1 // pred_region
      _
    $region33: #{_forward_device.1} parent=1 // pred_fallthru
      _
    %v33 = vld [vmem:[%s0] sm:$0xff]
    %v34 = vld [vmem:[%s1] sm:$0xff]
    %v35 = vld [vmem:[%s1 + $0x8] sm:$0xff]
    %v36 = vld [vmem:[%s1 + $0x10] sm:$0xff]
    %v37 = vld [vmem:[%s1 + $0x18] sm:$0xff]
    %v38 = vld [vmem:[%s3] sm:$0x1]
    %v40 = vlaneseq
    %v41 = vshrl.u32 %v40, 7
    %v42 = vsub.s32 0, %v41
    %v43 = vrot.slane %v38, %v42
    %vm45 = vcmask 261120
    %v47 = vsel %vm45, %v33, 0
    %49 = vmatprep.subr.mxu0 0.0
    %50 = vmatpush1.msra.mxu0 %v34
    %51 = vmatprep.subr.mxu0 0.0
    %52 = vmatpush1.msra.mxu0 %v35
    %53 = vmatprep.subr.mxu0 0.0
    %54 = vmatpush1.msra.mxu0 %v36
    %55 = vmatprep.subr.mxu0 0.0
    %56 = vmatpush1.msra.mxu0 %v37
    %57 = vmatprep.subr.mxu0 0.0
    %58 = vmatpush1.msra.mxu0 0.0
    %59 = vmatprep.subr.mxu0 0.0
    %60 = vmatpush1.msra.mxu0 0.0
    %61 = vmatprep.subr.mxu0 0.0
    %62 = vmatpush1.msra.mxu0 0.0
    %63 = vmatprep.subr.mxu0 0.0
    %64 = vmatpush1.msra.mxu0 0.0
    %65 = vmatprep.subr.mxu0 0.0
    %66 = vmatpush1.msra.mxu0 0.0
    %67 = vmatprep.subr.mxu0 0.0
    %68 = vmatpush1.msra.mxu0 0.0
    %69 = vmatprep.subr.mxu0 0.0
    %70 = vmatpush1.msra.mxu0 0.0
    %71 = vmatprep.subr.mxu0 0.0
    %72 = vmatpush1.msra.mxu0 0.0
    %73 = vmatprep.subr.mxu0 0.0
    %74 = vmatpush1.msra.mxu0 0.0
    %75 = vmatprep.subr.mxu0 0.0
    %76 = vmatpush1.msra.mxu0 0.0
    %77 = vmatprep.subr.mxu0 0.0
    %78 = vmatpush1.msra.mxu0 0.0
    %79 = vmatprep.subr.mxu0 0.0
    %80 = vmatpush1.msra.mxu0 0.0
    %81 = vmatprep.subr.mxu0 0.0
    %82 = vmatpush1.msra.mxu0 0.0
    %83 = vmatprep.subr.mxu0 0.0
    %84 = vmatpush1.msra.mxu0 0.0
    %85 = vmatprep.subr.mxu0 0.0
    %86 = vmatpush1.msra.mxu0 0.0
    %87 = vmatprep.subr.mxu0 0.0
    %88 = vmatpush1.msra.mxu0 0.0
    %89 = vmatprep.subr.mxu0 0.0
    %90 = vmatpush1.msra.mxu0 0.0
    %91 = vmatprep.subr.mxu0 0.0
    %92 = vmatpush1.msra.mxu0 0.0
    %93 = vmatprep.subr.mxu0 0.0
    %94 = vmatpush1.msra.mxu0 0.0
    %95 = vmatprep.subr.mxu0 0.0
    %96 = vmatpush1.msra.mxu0 0.0
    %97 = vmatprep.subr.mxu0 0.0
    %98 = vmatpush1.msra.mxu0 0.0
    %99 = vmatprep.subr.mxu0 0.0
    %100 = vmatpush1.msra.mxu0 0.0
    %101 = vmatprep.subr.mxu0 0.0
    %102 = vmatpush1.msra.mxu0 0.0
    %103 = vmatprep.subr.mxu0 0.0
    %104 = vmatpush1.msra.mxu0 0.0
    %105 = vmatprep.subr.mxu0 0.0
    %106 = vmatpush1.msra.mxu0 0.0
    %107 = vmatprep.subr.mxu0 0.0
    %108 = vmatpush1.msra.mxu0 0.0
    %109 = vmatprep.subr.mxu0 0.0
    %110 = vmatpush1.msra.mxu0 0.0
    %111 = vmatprep.subr.mxu0 0.0
    %112 = vmatpush1.msra.mxu0 0.0
    %113 = vmatprep.mubr.f32.mxu0 0.0
    %114 = vmatmul.mubr.f32.gmra.mrb[0].mxu0 %v47
    %v115 = vpop.f32.mrb[0].mxu0
    %v116 = vadd.f32 %v43, %v115
    %v117 = vpop.f32.mrb[0].mxu0
    %118 = vdwg.mxu0
    %119 = vst [vmem:[#allocation2] sm:$0xff] %v116
    %v120 = vld [vmem:[%s2] sm:$0xff]
    %v121 = vld [vmem:[%s2 + $0x8] sm:$0xff]
    %v122 = vld [vmem:[%s2 + $0x10] sm:$0xff]
    %v123 = vld [vmem:[%s2 + $0x18] sm:$0xff]
    %v124 = vld [vmem:[#allocation2] sm:$0x1]
    %v126 = vsel %vm45, 0.0, 0
    %128 = vmatprep.subr.mxu0 0.0
    %129 = vmatpush1.msra.mxu0 %v120
    %130 = vmatprep.subr.mxu0 0.0
    %131 = vmatpush1.msra.mxu0 %v121
    %132 = vmatprep.subr.mxu0 0.0
    %133 = vmatpush1.msra.mxu0 %v122
    %134 = vmatprep.subr.mxu0 0.0
    %135 = vmatpush1.msra.mxu0 %v123
    %136 = vmatprep.subr.mxu0 0.0
    %137 = vmatpush1.msra.mxu0 0.0
    %138 = vmatprep.subr.mxu0 0.0
    %139 = vmatpush1.msra.mxu0 0.0
    %140 = vmatprep.subr.mxu0 0.0
    %141 = vmatpush1.msra.mxu0 0.0
    %142 = vmatprep.subr.mxu0 0.0
    %143 = vmatpush1.msra.mxu0 0.0
    %144 = vmatprep.subr.mxu0 0.0
    %145 = vmatpush1.msra.mxu0 0.0
    %146 = vmatprep.subr.mxu0 0.0
    %147 = vmatpush1.msra.mxu0 0.0
    %148 = vmatprep.subr.mxu0 0.0
    %149 = vmatpush1.msra.mxu0 0.0
    %150 = vmatprep.subr.mxu0 0.0
    %151 = vmatpush1.msra.mxu0 0.0
    %152 = vmatprep.subr.mxu0 0.0
    %153 = vmatpush1.msra.mxu0 0.0
    %154 = vmatprep.subr.mxu0 0.0
    %155 = vmatpush1.msra.mxu0 0.0
    %156 = vmatprep.subr.mxu0 0.0
    %157 = vmatpush1.msra.mxu0 0.0
    %158 = vmatprep.subr.mxu0 0.0
    %159 = vmatpush1.msra.mxu0 0.0
    %160 = vmatprep.subr.mxu0 0.0
    %161 = vmatpush1.msra.mxu0 0.0
    %162 = vmatprep.subr.mxu0 0.0
    %163 = vmatpush1.msra.mxu0 0.0
    %164 = vmatprep.subr.mxu0 0.0
    %165 = vmatpush1.msra.mxu0 0.0
    %166 = vmatprep.subr.mxu0 0.0
    %167 = vmatpush1.msra.mxu0 0.0
    %168 = vmatprep.subr.mxu0 0.0
    %169 = vmatpush1.msra.mxu0 0.0
    %170 = vmatprep.subr.mxu0 0.0
    %171 = vmatpush1.msra.mxu0 0.0
    %172 = vmatprep.subr.mxu0 0.0
    %173 = vmatpush1.msra.mxu0 0.0
    %174 = vmatprep.subr.mxu0 0.0
    %175 = vmatpush1.msra.mxu0 0.0
    %176 = vmatprep.subr.mxu0 0.0
    %177 = vmatpush1.msra.mxu0 0.0
    %178 = vmatprep.subr.mxu0 0.0
    %179 = vmatpush1.msra.mxu0 0.0
    %180 = vmatprep.subr.mxu0 0.0
    %181 = vmatpush1.msra.mxu0 0.0
    %182 = vmatprep.subr.mxu0 0.0
    %183 = vmatpush1.msra.mxu0 0.0
    %184 = vmatprep.subr.mxu0 0.0
    %185 = vmatpush1.msra.mxu0 0.0
    %186 = vmatprep.subr.mxu0 0.0
    %187 = vmatpush1.msra.mxu0 0.0
    %188 = vmatprep.subr.mxu0 0.0
    %189 = vmatpush1.msra.mxu0 0.0
    %190 = vmatprep.subr.mxu0 0.0
    %191 = vmatpush1.msra.mxu0 0.0
    %192 = vmatprep.mubr.f32.mxu0 0.0
    %193 = vmatmul.mubr.f32.gmra.mrb[0].mxu0 %v126
    %v194 = vpop.f32.mrb[0].mxu0
    %v195 = vadd.f32 0.0, %v194
    %v196 = vpop.f32.mrb[0].mxu0
    %197 = vdwg.mxu0
    %v198 = vadd.f32 %v124, %v195
    %v199 = vxor.u32 %v198, 2147483648
    %v200 = vmul.f32 %v199, 1.442695
    %v201 = vpow.pop %v200
    %v202 = vadd.f32 %v201, 1.0
    %v203 = vrcp.pop %v202
    %v204 = vmul.f32 1.0, %v203
    %v205 = vtanh.pop %v198
    %v206 = vmul.f32 %v204, 0.0
    %208 = vrot.lane.b32.xlu0 %v205, 32
    %v209 = vpop.permute.xlu0 %208
    %v211 = vmul.f32 %v204, %v209
    %213 = vrot.lane.b32.xlu0 %v211, 32
    %v214 = vpop.permute.xlu0 %213
    %v216 = vadd.f32 %v206, %v214
    %v217 = vtanh.pop %v216
    %219 = vrot.lane.b32.xlu0 %v217, 32
    %v220 = vpop.permute.xlu0 %219
    %v222 = vmul.f32 %v204, %v220
    %224 = vrot.lane.b32.xlu0 %v222, 64
    %v225 = vpop.permute.xlu0 %224
    %vm227 = vcmask 122880
    %228 = vst.msk [vmem:[#allocation3] sm:$0x1] %vm227, %v225
    %vm229 = vcmask 254080
    %230 = vst.msk [vmem:[#allocation3 + $0x7] sm:$0x1] %vm229, %v225
    %v231 = vld [vmem:[#allocation2 + $0x1] sm:$0x1]
    %v232 = vsel %vm45, %v225, 0
    %234 = vmatprep.subr.mxu0 0.0
    %235 = vmatpush1.msra.mxu0 %v120
    %236 = vmatprep.subr.mxu0 0.0
    %237 = vmatpush1.msra.mxu0 %v121
    %238 = vmatprep.subr.mxu0 0.0
    %239 = vmatpush1.msra.mxu0 %v122
    %240 = vmatprep.subr.mxu0 0.0
    %241 = vmatpush1.msra.mxu0 %v123
    %242 = vmatprep.subr.mxu0 0.0
    %243 = vmatpush1.msra.mxu0 0.0
    %244 = vmatprep.subr.mxu0 0.0
    %245 = vmatpush1.msra.mxu0 0.0
    %246 = vmatprep.subr.mxu0 0.0
    %247 = vmatpush1.msra.mxu0 0.0
    %248 = vmatprep.subr.mxu0 0.0
    %249 = vmatpush1.msra.mxu0 0.0
    %250 = vmatprep.subr.mxu0 0.0
    %251 = vmatpush1.msra.mxu0 0.0
    %252 = vmatprep.subr.mxu0 0.0
    %253 = vmatpush1.msra.mxu0 0.0
    %254 = vmatprep.subr.mxu0 0.0
    %255 = vmatpush1.msra.mxu0 0.0
    %256 = vmatprep.subr.mxu0 0.0
    %257 = vmatpush1.msra.mxu0 0.0
    %258 = vmatprep.subr.mxu0 0.0
    %259 = vmatpush1.msra.mxu0 0.0
    %260 = vmatprep.subr.mxu0 0.0
    %261 = vmatpush1.msra.mxu0 0.0
    %262 = vmatprep.subr.mxu0 0.0
    %263 = vmatpush1.msra.mxu0 0.0
    %264 = vmatprep.subr.mxu0 0.0
    %265 = vmatpush1.msra.mxu0 0.0
    %266 = vmatprep.subr.mxu0 0.0
    %267 = vmatpush1.msra.mxu0 0.0
    %268 = vmatprep.subr.mxu0 0.0
    %269 = vmatpush1.msra.mxu0 0.0
    %270 = vmatprep.subr.mxu0 0.0
    %271 = vmatpush1.msra.mxu0 0.0
    %272 = vmatprep.subr.mxu0 0.0
    %273 = vmatpush1.msra.mxu0 0.0
    %274 = vmatprep.subr.mxu0 0.0
    %275 = vmatpush1.msra.mxu0 0.0
    %276 = vmatprep.subr.mxu0 0.0
    %277 = vmatpush1.msra.mxu0 0.0
    %278 = vmatprep.subr.mxu0 0.0
    %279 = vmatpush1.msra.mxu0 0.0
    %280 = vmatprep.subr.mxu0 0.0
    %281 = vmatpush1.msra.mxu0 0.0
    %282 = vmatprep.subr.mxu0 0.0
    %283 = vmatpush1.msra.mxu0 0.0
    %284 = vmatprep.subr.mxu0 0.0
    %285 = vmatpush1.msra.mxu0 0.0
    %286 = vmatprep.subr.mxu0 0.0
    %287 = vmatpush1.msra.mxu0 0.0
    %288 = vmatprep.subr.mxu0 0.0
    %289 = vmatpush1.msra.mxu0 0.0
    %290 = vmatprep.subr.mxu0 0.0
    %291 = vmatpush1.msra.mxu0 0.0
    %292 = vmatprep.subr.mxu0 0.0
    %293 = vmatpush1.msra.mxu0 0.0
    %294 = vmatprep.subr.mxu0 0.0
    %295 = vmatpush1.msra.mxu0 0.0
    %296 = vmatprep.subr.mxu0 0.0
    %297 = vmatpush1.msra.mxu0 0.0
    %298 = vmatprep.mubr.f32.mxu0 0.0
    %299 = vmatmul.mubr.f32.gmra.mrb[0].mxu0 %v232
    %v300 = vpop.f32.mrb[0].mxu0
    %v301 = vadd.f32 0.0, %v300
    %v302 = vpop.f32.mrb[0].mxu0
    %303 = vdwg.mxu0
    %v304 = vadd.f32 %v231, %v301
    %v305 = vxor.u32 %v304, 2147483648
    %v306 = vmul.f32 %v305, 1.442695
    %v307 = vpow.pop %v306
    %v308 = vadd.f32 %v307, 1.0
    %v309 = vrcp.pop %v308
    %v310 = vmul.f32 1.0, %v309
    %v311 = vtanh.pop %v304
    %v312 = vmul.f32 %v310, %v216
    %314 = vrot.lane.b32.xlu0 %v311, 32
    %v315 = vpop.permute.xlu0 %314
    %v317 = vmul.f32 %v310, %v315
    %319 = vrot.lane.b32.xlu0 %v317, 32
    %v320 = vpop.permute.xlu0 %319
    %v322 = vadd.f32 %v312, %v320
    %v323 = vtanh.pop %v322
    %325 = vrot.lane.b32.xlu0 %v323, 32
    %v326 = vpop.permute.xlu0 %325
    %v328 = vmul.f32 %v310, %v326
    %330 = vrot.lane.b32.xlu0 %v328, 64
    %v331 = vpop.permute.xlu0 %330
    %333 = vst.msk [vmem:[#allocation3 + $0x1] sm:$0x1] %vm227, %v331
    %334 = vst.msk [vmem:[#allocation3 + $0x6] sm:$0x1] %vm229, %v331
    %v335 = vld [vmem:[#allocation2 + $0x2] sm:$0x1]
    %v336 = vsel %vm45, %v331, 0
    %338 = vmatprep.subr.mxu0 0.0
    %339 = vmatpush1.msra.mxu0 %v120
    %340 = vmatprep.subr.mxu0 0.0
    %341 = vmatpush1.msra.mxu0 %v121
    %342 = vmatprep.subr.mxu0 0.0
    %343 = vmatpush1.msra.mxu0 %v122
    %344 = vmatprep.subr.mxu0 0.0
    %345 = vmatpush1.msra.mxu0 %v123
    %346 = vmatprep.subr.mxu0 0.0
    %347 = vmatpush1.msra.mxu0 0.0
    %348 = vmatprep.subr.mxu0 0.0
    %349 = vmatpush1.msra.mxu0 0.0
    %350 = vmatprep.subr.mxu0 0.0
    %351 = vmatpush1.msra.mxu0 0.0
    %352 = vmatprep.subr.mxu0 0.0
    %353 = vmatpush1.msra.mxu0 0.0
    %354 = vmatprep.subr.mxu0 0.0
    %355 = vmatpush1.msra.mxu0 0.0
    %356 = vmatprep.subr.mxu0 0.0
    %357 = vmatpush1.msra.mxu0 0.0
    %358 = vmatprep.subr.mxu0 0.0
    %359 = vmatpush1.msra.mxu0 0.0
    %360 = vmatprep.subr.mxu0 0.0
    %361 = vmatpush1.msra.mxu0 0.0
    %362 = vmatprep.subr.mxu0 0.0
    %363 = vmatpush1.msra.mxu0 0.0
    %364 = vmatprep.subr.mxu0 0.0
    %365 = vmatpush1.msra.mxu0 0.0
    %366 = vmatprep.subr.mxu0 0.0
    %367 = vmatpush1.msra.mxu0 0.0
    %368 = vmatprep.subr.mxu0 0.0
    %369 = vmatpush1.msra.mxu0 0.0
    %370 = vmatprep.subr.mxu0 0.0
    %371 = vmatpush1.msra.mxu0 0.0
    %372 = vmatprep.subr.mxu0 0.0
    %373 = vmatpush1.msra.mxu0 0.0
    %374 = vmatprep.subr.mxu0 0.0
    %375 = vmatpush1.msra.mxu0 0.0
    %376 = vmatprep.subr.mxu0 0.0
    %377 = vmatpush1.msra.mxu0 0.0
    %378 = vmatprep.subr.mxu0 0.0
    %379 = vmatpush1.msra.mxu0 0.0
    %380 = vmatprep.subr.mxu0 0.0
    %381 = vmatpush1.msra.mxu0 0.0
    %382 = vmatprep.subr.mxu0 0.0
    %383 = vmatpush1.msra.mxu0 0.0
    %384 = vmatprep.subr.mxu0 0.0
    %385 = vmatpush1.msra.mxu0 0.0
    %386 = vmatprep.subr.mxu0 0.0
    %387 = vmatpush1.msra.mxu0 0.0
    %388 = vmatprep.subr.mxu0 0.0
    %389 = vmatpush1.msra.mxu0 0.0
    %390 = vmatprep.subr.mxu0 0.0
    %391 = vmatpush1.msra.mxu0 0.0
    %392 = vmatprep.subr.mxu0 0.0
    %393 = vmatpush1.msra.mxu0 0.0
    %394 = vmatprep.subr.mxu0 0.0
    %395 = vmatpush1.msra.mxu0 0.0
    %396 = vmatprep.subr.mxu0 0.0
    %397 = vmatpush1.msra.mxu0 0.0
    %398 = vmatprep.subr.mxu0 0.0
    %399 = vmatpush1.msra.mxu0 0.0
    %400 = vmatprep.subr.mxu0 0.0
    %401 = vmatpush1.msra.mxu0 0.0
    %402 = vmatprep.mubr.f32.mxu0 0.0
    %403 = vmatmul.mubr.f32.gmra.mrb[0].mxu0 %v336
    %v404 = vpop.f32.mrb[0].mxu0
    %v405 = vadd.f32 0.0, %v404
    %v406 = vpop.f32.mrb[0].mxu0
    %407 = vdwg.mxu0
    %v408 = vadd.f32 %v335, %v405
    %v409 = vxor.u32 %v408, 2147483648
    %v410 = vmul.f32 %v409, 1.442695
    %v411 = vpow.pop %v410
    %v412 = vadd.f32 %v411, 1.0
    %v413 = vrcp.pop %v412
    %v414 = vmul.f32 1.0, %v413
    %v415 = vtanh.pop %v408
    %v416 = vmul.f32 %v414, %v322
    %418 = vrot.lane.b32.xlu0 %v415, 32
    %v419 = vpop.permute.xlu0 %418
    %v421 = vmul.f32 %v414, %v419
    %423 = vrot.lane.b32.xlu0 %v421, 32
    %v424 = vpop.permute.xlu0 %423
    %v426 = vadd.f32 %v416, %v424
    %v427 = vtanh.pop %v426
    %429 = vrot.lane.b32.xlu0 %v427, 32
    %v430 = vpop.permute.xlu0 %429
    %v432 = vmul.f32 %v414, %v430
    %434 = vrot.lane.b32.xlu0 %v432, 64
    %v435 = vpop.permute.xlu0 %434
    %437 = vst.msk [vmem:[#allocation3 + $0x2] sm:$0x1] %vm227, %v435
    %438 = vst.msk [vmem:[#allocation3 + $0x5] sm:$0x1] %vm229, %v435
    %v439 = vld [vmem:[#allocation2 + $0x3] sm:$0x1]
    %v440 = vsel %vm45, %v435, 0
    %442 = vmatprep.subr.mxu0 0.0
    %443 = vmatpush1.msra.mxu0 %v120
    %444 = vmatprep.subr.mxu0 0.0
    %445 = vmatpush1.msra.mxu0 %v121
    %446 = vmatprep.subr.mxu0 0.0
    %447 = vmatpush1.msra.mxu0 %v122
    %448 = vmatprep.subr.mxu0 0.0
    %449 = vmatpush1.msra.mxu0 %v123
    %450 = vmatprep.subr.mxu0 0.0
    %451 = vmatpush1.msra.mxu0 0.0
    %452 = vmatprep.subr.mxu0 0.0
    %453 = vmatpush1.msra.mxu0 0.0
    %454 = vmatprep.subr.mxu0 0.0
    %455 = vmatpush1.msra.mxu0 0.0
    %456 = vmatprep.subr.mxu0 0.0
    %457 = vmatpush1.msra.mxu0 0.0
    %458 = vmatprep.subr.mxu0 0.0
    %459 = vmatpush1.msra.mxu0 0.0
    %460 = vmatprep.subr.mxu0 0.0
    %461 = vmatpush1.msra.mxu0 0.0
    %462 = vmatprep.subr.mxu0 0.0
    %463 = vmatpush1.msra.mxu0 0.0
    %464 = vmatprep.subr.mxu0 0.0
    %465 = vmatpush1.msra.mxu0 0.0
    %466 = vmatprep.subr.mxu0 0.0
    %467 = vmatpush1.msra.mxu0 0.0
    %468 = vmatprep.subr.mxu0 0.0
    %469 = vmatpush1.msra.mxu0 0.0
    %470 = vmatprep.subr.mxu0 0.0
    %471 = vmatpush1.msra.mxu0 0.0
    %472 = vmatprep.subr.mxu0 0.0
    %473 = vmatpush1.msra.mxu0 0.0
    %474 = vmatprep.subr.mxu0 0.0
    %475 = vmatpush1.msra.mxu0 0.0
    %476 = vmatprep.subr.mxu0 0.0
    %477 = vmatpush1.msra.mxu0 0.0
    %478 = vmatprep.subr.mxu0 0.0
    %479 = vmatpush1.msra.mxu0 0.0
    %480 = vmatprep.subr.mxu0 0.0
    %481 = vmatpush1.msra.mxu0 0.0
    %482 = vmatprep.subr.mxu0 0.0
    %483 = vmatpush1.msra.mxu0 0.0
    %484 = vmatprep.subr.mxu0 0.0
    %485 = vmatpush1.msra.mxu0 0.0
    %486 = vmatprep.subr.mxu0 0.0
    %487 = vmatpush1.msra.mxu0 0.0
    %488 = vmatprep.subr.mxu0 0.0
    %489 = vmatpush1.msra.mxu0 0.0
    %490 = vmatprep.subr.mxu0 0.0
    %491 = vmatpush1.msra.mxu0 0.0
    %492 = vmatprep.subr.mxu0 0.0
    %493 = vmatpush1.msra.mxu0 0.0
    %494 = vmatprep.subr.mxu0 0.0
    %495 = vmatpush1.msra.mxu0 0.0
    %496 = vmatprep.subr.mxu0 0.0
    %497 = vmatpush1.msra.mxu0 0.0
    %498 = vmatprep.subr.mxu0 0.0
    %499 = vmatpush1.msra.mxu0 0.0
    %500 = vmatprep.subr.mxu0 0.0
    %501 = vmatpush1.msra.mxu0 0.0
    %502 = vmatprep.subr.mxu0 0.0
    %503 = vmatpush1.msra.mxu0 0.0
    %504 = vmatprep.subr.mxu0 0.0
    %505 = vmatpush1.msra.mxu0 0.0
    %506 = vmatprep.mubr.f32.mxu0 0.0
    %507 = vmatmul.mubr.f32.gmra.mrb[0].mxu0 %v440
    %v508 = vpop.f32.mrb[0].mxu0
    %v509 = vadd.f32 0.0, %v508
    %v510 = vpop.f32.mrb[0].mxu0
    %511 = vdwg.mxu0
    %v512 = vadd.f32 %v439, %v509
    %v513 = vxor.u32 %v512, 2147483648
    %v514 = vmul.f32 %v513, 1.442695
    %v515 = vpow.pop %v514
    %v516 = vadd.f32 %v515, 1.0
    %v517 = vrcp.pop %v516
    %v518 = vmul.f32 1.0, %v517
    %v519 = vtanh.pop %v512
    %v520 = vmul.f32 %v518, %v426
    %522 = vrot.lane.b32.xlu0 %v519, 32
    %v523 = vpop.permute.xlu0 %522
    %v525 = vmul.f32 %v518, %v523
    %527 = vrot.lane.b32.xlu0 %v525, 32
    %v528 = vpop.permute.xlu0 %527
    %v530 = vadd.f32 %v520, %v528
    %v531 = vtanh.pop %v530
    %533 = vrot.lane.b32.xlu0 %v531, 32
    %v534 = vpop.permute.xlu0 %533
    %v536 = vmul.f32 %v518, %v534
    %538 = vrot.lane.b32.xlu0 %v536, 64
    %v539 = vpop.permute.xlu0 %538
    %541 = vst.msk [vmem:[#allocation3 + $0x3] sm:$0x1] %vm227, %v539
    %542 = vst.msk [vmem:[#allocation3 + $0x4] sm:$0x1] %vm229, %v539
    %v543 = vld [vmem:[#allocation2 + $0x4] sm:$0x1]
    %v544 = vsel %vm45, %v539, 0
    %546 = vmatprep.subr.mxu0 0.0
    %547 = vmatpush1.msra.mxu0 %v120
    %548 = vmatprep.subr.mxu0 0.0
    %549 = vmatpush1.msra.mxu0 %v121
    %550 = vmatprep.subr.mxu0 0.0
    %551 = vmatpush1.msra.mxu0 %v122
    %552 = vmatprep.subr.mxu0 0.0
    %553 = vmatpush1.msra.mxu0 %v123
    %554 = vmatprep.subr.mxu0 0.0
    %555 = vmatpush1.msra.mxu0 0.0
    %556 = vmatprep.subr.mxu0 0.0
    %557 = vmatpush1.msra.mxu0 0.0
    %558 = vmatprep.subr.mxu0 0.0
    %559 = vmatpush1.msra.mxu0 0.0
    %560 = vmatprep.subr.mxu0 0.0
    %561 = vmatpush1.msra.mxu0 0.0
    %562 = vmatprep.subr.mxu0 0.0
    %563 = vmatpush1.msra.mxu0 0.0
    %564 = vmatprep.subr.mxu0 0.0
    %565 = vmatpush1.msra.mxu0 0.0
    %566 = vmatprep.subr.mxu0 0.0
    %567 = vmatpush1.msra.mxu0 0.0
    %568 = vmatprep.subr.mxu0 0.0
    %569 = vmatpush1.msra.mxu0 0.0
    %570 = vmatprep.subr.mxu0 0.0
    %571 = vmatpush1.msra.mxu0 0.0
    %572 = vmatprep.subr.mxu0 0.0
    %573 = vmatpush1.msra.mxu0 0.0
    %574 = vmatprep.subr.mxu0 0.0
    %575 = vmatpush1.msra.mxu0 0.0
    %576 = vmatprep.subr.mxu0 0.0
    %577 = vmatpush1.msra.mxu0 0.0
    %578 = vmatprep.subr.mxu0 0.0
    %579 = vmatpush1.msra.mxu0 0.0
    %580 = vmatprep.subr.mxu0 0.0
    %581 = vmatpush1.msra.mxu0 0.0
    %582 = vmatprep.subr.mxu0 0.0
    %583 = vmatpush1.msra.mxu0 0.0
    %584 = vmatprep.subr.mxu0 0.0
    %585 = vmatpush1.msra.mxu0 0.0
    %586 = vmatprep.subr.mxu0 0.0
    %587 = vmatpush1.msra.mxu0 0.0
    %588 = vmatprep.subr.mxu0 0.0
    %589 = vmatpush1.msra.mxu0 0.0
    %590 = vmatprep.subr.mxu0 0.0
    %591 = vmatpush1.msra.mxu0 0.0
    %592 = vmatprep.subr.mxu0 0.0
    %593 = vmatpush1.msra.mxu0 0.0
    %594 = vmatprep.subr.mxu0 0.0
    %595 = vmatpush1.msra.mxu0 0.0
    %596 = vmatprep.subr.mxu0 0.0
    %597 = vmatpush1.msra.mxu0 0.0
    %598 = vmatprep.subr.mxu0 0.0
    %599 = vmatpush1.msra.mxu0 0.0
    %600 = vmatprep.subr.mxu0 0.0
    %601 = vmatpush1.msra.mxu0 0.0
    %602 = vmatprep.subr.mxu0 0.0
    %603 = vmatpush1.msra.mxu0 0.0
    %604 = vmatprep.subr.mxu0 0.0
    %605 = vmatpush1.msra.mxu0 0.0
    %606 = vmatprep.subr.mxu0 0.0
    %607 = vmatpush1.msra.mxu0 0.0
    %608 = vmatprep.subr.mxu0 0.0
    %609 = vmatpush1.msra.mxu0 0.0
    %610 = vmatprep.mubr.f32.mxu0 0.0
    %611 = vmatmul.mubr.f32.gmra.mrb[0].mxu0 %v544
    %v612 = vpop.f32.mrb[0].mxu0
    %v613 = vadd.f32 0.0, %v612
    %v614 = vpop.f32.mrb[0].mxu0
    %615 = vdwg.mxu0
    %v616 = vadd.f32 %v543, %v613
    %v617 = vxor.u32 %v616, 2147483648
    %v618 = vmul.f32 %v617, 1.442695
    %v619 = vpow.pop %v618
    %v620 = vadd.f32 %v619, 1.0
    %v621 = vrcp.pop %v620
    %v622 = vmul.f32 1.0, %v621
    %v623 = vtanh.pop %v616
    %v624 = vmul.f32 %v622, %v530
    %626 = vrot.lane.b32.xlu0 %v623, 32
    %v627 = vpop.permute.xlu0 %626
    %v629 = vmul.f32 %v622, %v627
    %631 = vrot.lane.b32.xlu0 %v629, 32
    %v632 = vpop.permute.xlu0 %631
    %v634 = vadd.f32 %v624, %v632
    %v635 = vtanh.pop %v634
    %637 = vrot.lane.b32.xlu0 %v635, 32
    %v638 = vpop.permute.xlu0 %637
    %v640 = vmul.f32 %v622, %v638
    %642 = vrot.lane.b32.xlu0 %v640, 64
    %v643 = vpop.permute.xlu0 %642
    %645 = vst.msk [vmem:[#allocation3 + $0x4] sm:$0x1] %vm227, %v643
    %646 = vst.msk [vmem:[#allocation3 + $0x3] sm:$0x1] %vm229, %v643
    %v647 = vld [vmem:[#allocation2 + $0x5] sm:$0x1]
    %v648 = vsel %vm45, %v643, 0
    %650 = vmatprep.subr.mxu0 0.0
    %651 = vmatpush1.msra.mxu0 %v120
    %652 = vmatprep.subr.mxu0 0.0
    %653 = vmatpush1.msra.mxu0 %v121
    %654 = vmatprep.subr.mxu0 0.0
    %655 = vmatpush1.msra.mxu0 %v122
    %656 = vmatprep.subr.mxu0 0.0
    %657 = vmatpush1.msra.mxu0 %v123
    %658 = vmatprep.subr.mxu0 0.0
    %659 = vmatpush1.msra.mxu0 0.0
    %660 = vmatprep.subr.mxu0 0.0
    %661 = vmatpush1.msra.mxu0 0.0
    %662 = vmatprep.subr.mxu0 0.0
    %663 = vmatpush1.msra.mxu0 0.0
    %664 = vmatprep.subr.mxu0 0.0
    %665 = vmatpush1.msra.mxu0 0.0
    %666 = vmatprep.subr.mxu0 0.0
    %667 = vmatpush1.msra.mxu0 0.0
    %668 = vmatprep.subr.mxu0 0.0
    %669 = vmatpush1.msra.mxu0 0.0
    %670 = vmatprep.subr.mxu0 0.0
    %671 = vmatpush1.msra.mxu0 0.0
    %672 = vmatprep.subr.mxu0 0.0
    %673 = vmatpush1.msra.mxu0 0.0
    %674 = vmatprep.subr.mxu0 0.0
    %675 = vmatpush1.msra.mxu0 0.0
    %676 = vmatprep.subr.mxu0 0.0
    %677 = vmatpush1.msra.mxu0 0.0
    %678 = vmatprep.subr.mxu0 0.0
    %679 = vmatpush1.msra.mxu0 0.0
    %680 = vmatprep.subr.mxu0 0.0
    %681 = vmatpush1.msra.mxu0 0.0
    %682 = vmatprep.subr.mxu0 0.0
    %683 = vmatpush1.msra.mxu0 0.0
    %684 = vmatprep.subr.mxu0 0.0
    %685 = vmatpush1.msra.mxu0 0.0
    %686 = vmatprep.subr.mxu0 0.0
    %687 = vmatpush1.msra.mxu0 0.0
    %688 = vmatprep.subr.mxu0 0.0
    %689 = vmatpush1.msra.mxu0 0.0
    %690 = vmatprep.subr.mxu0 0.0
    %691 = vmatpush1.msra.mxu0 0.0
    %692 = vmatprep.subr.mxu0 0.0
    %693 = vmatpush1.msra.mxu0 0.0
    %694 = vmatprep.subr.mxu0 0.0
    %695 = vmatpush1.msra.mxu0 0.0
    %696 = vmatprep.subr.mxu0 0.0
    %697 = vmatpush1.msra.mxu0 0.0
    %698 = vmatprep.subr.mxu0 0.0
    %699 = vmatpush1.msra.mxu0 0.0
    %700 = vmatprep.subr.mxu0 0.0
    %701 = vmatpush1.msra.mxu0 0.0
    %702 = vmatprep.subr.mxu0 0.0
    %703 = vmatpush1.msra.mxu0 0.0
    %704 = vmatprep.subr.mxu0 0.0
    %705 = vmatpush1.msra.mxu0 0.0
    %706 = vmatprep.subr.mxu0 0.0
    %707 = vmatpush1.msra.mxu0 0.0
    %708 = vmatprep.subr.mxu0 0.0
    %709 = vmatpush1.msra.mxu0 0.0
    %710 = vmatprep.subr.mxu0 0.0
    %711 = vmatpush1.msra.mxu0 0.0
    %712 = vmatprep.subr.mxu0 0.0
    %713 = vmatpush1.msra.mxu0 0.0
    %714 = vmatprep.mubr.f32.mxu0 0.0
    %715 = vmatmul.mubr.f32.gmra.mrb[0].mxu0 %v648
    %v716 = vpop.f32.mrb[0].mxu0
    %v717 = vadd.f32 0.0, %v716
    %v718 = vpop.f32.mrb[0].mxu0
    %719 = vdwg.mxu0
    %v720 = vadd.f32 %v647, %v717
    %v721 = vxor.u32 %v720, 2147483648
    %v722 = vmul.f32 %v721, 1.442695
    %v723 = vpow.pop %v722
    %v724 = vadd.f32 %v723, 1.0
    %v725 = vrcp.pop %v724
    %v726 = vmul.f32 1.0, %v725
    %v727 = vtanh.pop %v720
    %v728 = vmul.f32 %v726, %v634
    %730 = vrot.lane.b32.xlu0 %v727, 32
    %v731 = vpop.permute.xlu0 %730
    %v733 = vmul.f32 %v726, %v731
    %735 = vrot.lane.b32.xlu0 %v733, 32
    %v736 = vpop.permute.xlu0 %735
    %v738 = vadd.f32 %v728, %v736
    %v739 = vtanh.pop %v738
    %741 = vrot.lane.b32.xlu0 %v739, 32
    %v742 = vpop.permute.xlu0 %741
    %v744 = vmul.f32 %v726, %v742
    %746 = vrot.lane.b32.xlu0 %v744, 64
    %v747 = vpop.permute.xlu0 %746
    %749 = vst.msk [vmem:[#allocation3 + $0x5] sm:$0x1] %vm227, %v747
    %750 = vst.msk [vmem:[#allocation3 + $0x2] sm:$0x1] %vm229, %v747
    %v751 = vld [vmem:[#allocation2 + $0x6] sm:$0x1]
    %v752 = vsel %vm45, %v747, 0
    %754 = vmatprep.subr.mxu0 0.0
    %755 = vmatpush1.msra.mxu0 %v120
    %756 = vmatprep.subr.mxu0 0.0
    %757 = vmatpush1.msra.mxu0 %v121
    %758 = vmatprep.subr.mxu0 0.0
    %759 = vmatpush1.msra.mxu0 %v122
    %760 = vmatprep.subr.mxu0 0.0
    %761 = vmatpush1.msra.mxu0 %v123
    %762 = vmatprep.subr.mxu0 0.0
    %763 = vmatpush1.msra.mxu0 0.0
    %764 = vmatprep.subr.mxu0 0.0
    %765 = vmatpush1.msra.mxu0 0.0
    %766 = vmatprep.subr.mxu0 0.0
    %767 = vmatpush1.msra.mxu0 0.0
    %768 = vmatprep.subr.mxu0 0.0
    %769 = vmatpush1.msra.mxu0 0.0
    %770 = vmatprep.subr.mxu0 0.0
    %771 = vmatpush1.msra.mxu0 0.0
    %772 = vmatprep.subr.mxu0 0.0
    %773 = vmatpush1.msra.mxu0 0.0
    %774 = vmatprep.subr.mxu0 0.0
    %775 = vmatpush1.msra.mxu0 0.0
    %776 = vmatprep.subr.mxu0 0.0
    %777 = vmatpush1.msra.mxu0 0.0
    %778 = vmatprep.subr.mxu0 0.0
    %779 = vmatpush1.msra.mxu0 0.0
    %780 = vmatprep.subr.mxu0 0.0
    %781 = vmatpush1.msra.mxu0 0.0
    %782 = vmatprep.subr.mxu0 0.0
    %783 = vmatpush1.msra.mxu0 0.0
    %784 = vmatprep.subr.mxu0 0.0
    %785 = vmatpush1.msra.mxu0 0.0
    %786 = vmatprep.subr.mxu0 0.0
    %787 = vmatpush1.msra.mxu0 0.0
    %788 = vmatprep.subr.mxu0 0.0
    %789 = vmatpush1.msra.mxu0 0.0
    %790 = vmatprep.subr.mxu0 0.0
    %791 = vmatpush1.msra.mxu0 0.0
    %792 = vmatprep.subr.mxu0 0.0
    %793 = vmatpush1.msra.mxu0 0.0
    %794 = vmatprep.subr.mxu0 0.0
    %795 = vmatpush1.msra.mxu0 0.0
    %796 = vmatprep.subr.mxu0 0.0
    %797 = vmatpush1.msra.mxu0 0.0
    %798 = vmatprep.subr.mxu0 0.0
    %799 = vmatpush1.msra.mxu0 0.0
    %800 = vmatprep.subr.mxu0 0.0
    %801 = vmatpush1.msra.mxu0 0.0
    %802 = vmatprep.subr.mxu0 0.0
    %803 = vmatpush1.msra.mxu0 0.0
    %804 = vmatprep.subr.mxu0 0.0
    %805 = vmatpush1.msra.mxu0 0.0
    %806 = vmatprep.subr.mxu0 0.0
    %807 = vmatpush1.msra.mxu0 0.0
    %808 = vmatprep.subr.mxu0 0.0
    %809 = vmatpush1.msra.mxu0 0.0
    %810 = vmatprep.subr.mxu0 0.0
    %811 = vmatpush1.msra.mxu0 0.0
    %812 = vmatprep.subr.mxu0 0.0
    %813 = vmatpush1.msra.mxu0 0.0
    %814 = vmatprep.subr.mxu0 0.0
    %815 = vmatpush1.msra.mxu0 0.0
    %816 = vmatprep.subr.mxu0 0.0
    %817 = vmatpush1.msra.mxu0 0.0
    %818 = vmatprep.mubr.f32.mxu0 0.0
    %819 = vmatmul.mubr.f32.gmra.mrb[0].mxu0 %v752
    %v820 = vpop.f32.mrb[0].mxu0
    %v821 = vadd.f32 0.0, %v820
    %v822 = vpop.f32.mrb[0].mxu0
    %823 = vdwg.mxu0
    %v824 = vadd.f32 %v751, %v821
    %v825 = vxor.u32 %v824, 2147483648
    %v826 = vmul.f32 %v825, 1.442695
    %v827 = vpow.pop %v826
    %v828 = vadd.f32 %v827, 1.0
    %v829 = vrcp.pop %v828
    %v830 = vmul.f32 1.0, %v829
    %v831 = vtanh.pop %v824
    %v832 = vmul.f32 %v830, %v738
    %834 = vrot.lane.b32.xlu0 %v831, 32
    %v835 = vpop.permute.xlu0 %834
    %v837 = vmul.f32 %v830, %v835
    %839 = vrot.lane.b32.xlu0 %v837, 32
    %v840 = vpop.permute.xlu0 %839
    %v842 = vadd.f32 %v832, %v840
    %v843 = vtanh.pop %v842
    %845 = vrot.lane.b32.xlu0 %v843, 32
    %v846 = vpop.permute.xlu0 %845
    %v848 = vmul.f32 %v830, %v846
    %850 = vrot.lane.b32.xlu0 %v848, 64
    %v851 = vpop.permute.xlu0 %850
    %853 = vst.msk [vmem:[#allocation3 + $0x6] sm:$0x1] %vm227, %v851
    %854 = vst.msk [vmem:[#allocation3 + $0x1] sm:$0x1] %vm229, %v851
    %v855 = vld [vmem:[#allocation2 + $0x7] sm:$0x1]
    %v856 = vsel %vm45, %v851, 0
    %858 = vmatprep.subr.mxu0 0.0
    %859 = vmatpush1.msra.mxu0 %v120
    %860 = vmatprep.subr.mxu0 0.0
    %861 = vmatpush1.msra.mxu0 %v121
    %862 = vmatprep.subr.mxu0 0.0
    %863 = vmatpush1.msra.mxu0 %v122
    %864 = vmatprep.subr.mxu0 0.0
    %865 = vmatpush1.msra.mxu0 %v123
    %866 = vmatprep.subr.mxu0 0.0
    %867 = vmatpush1.msra.mxu0 0.0
    %868 = vmatprep.subr.mxu0 0.0
    %869 = vmatpush1.msra.mxu0 0.0
    %870 = vmatprep.subr.mxu0 0.0
    %871 = vmatpush1.msra.mxu0 0.0
    %872 = vmatprep.subr.mxu0 0.0
    %873 = vmatpush1.msra.mxu0 0.0
    %874 = vmatprep.subr.mxu0 0.0
    %875 = vmatpush1.msra.mxu0 0.0
    %876 = vmatprep.subr.mxu0 0.0
    %877 = vmatpush1.msra.mxu0 0.0
    %878 = vmatprep.subr.mxu0 0.0
    %879 = vmatpush1.msra.mxu0 0.0
    %880 = vmatprep.subr.mxu0 0.0
    %881 = vmatpush1.msra.mxu0 0.0
    %882 = vmatprep.subr.mxu0 0.0
    %883 = vmatpush1.msra.mxu0 0.0
    %884 = vmatprep.subr.mxu0 0.0
    %885 = vmatpush1.msra.mxu0 0.0
    %886 = vmatprep.subr.mxu0 0.0
    %887 = vmatpush1.msra.mxu0 0.0
    %888 = vmatprep.subr.mxu0 0.0
    %889 = vmatpush1.msra.mxu0 0.0
    %890 = vmatprep.subr.mxu0 0.0
    %891 = vmatpush1.msra.mxu0 0.0
    %892 = vmatprep.subr.mxu0 0.0
    %893 = vmatpush1.msra.mxu0 0.0
    %894 = vmatprep.subr.mxu0 0.0
    %895 = vmatpush1.msra.mxu0 0.0
    %896 = vmatprep.subr.mxu0 0.0
    %897 = vmatpush1.msra.mxu0 0.0
    %898 = vmatprep.subr.mxu0 0.0
    %899 = vmatpush1.msra.mxu0 0.0
    %900 = vmatprep.subr.mxu0 0.0
    %901 = vmatpush1.msra.mxu0 0.0
    %902 = vmatprep.subr.mxu0 0.0
    %903 = vmatpush1.msra.mxu0 0.0
    %904 = vmatprep.subr.mxu0 0.0
    %905 = vmatpush1.msra.mxu0 0.0
    %906 = vmatprep.subr.mxu0 0.0
    %907 = vmatpush1.msra.mxu0 0.0
    %908 = vmatprep.subr.mxu0 0.0
    %909 = vmatpush1.msra.mxu0 0.0
    %910 = vmatprep.subr.mxu0 0.0
    %911 = vmatpush1.msra.mxu0 0.0
    %912 = vmatprep.subr.mxu0 0.0
    %913 = vmatpush1.msra.mxu0 0.0
    %914 = vmatprep.subr.mxu0 0.0
    %915 = vmatpush1.msra.mxu0 0.0
    %916 = vmatprep.subr.mxu0 0.0
    %917 = vmatpush1.msra.mxu0 0.0
    %918 = vmatprep.subr.mxu0 0.0
    %919 = vmatpush1.msra.mxu0 0.0
    %920 = vmatprep.subr.mxu0 0.0
    %921 = vmatpush1.msra.mxu0 0.0
    %922 = vmatprep.mubr.f32.mxu0 0.0
    %923 = vmatmul.mubr.f32.gmra.mrb[0].mxu0 %v856
    %v924 = vpop.f32.mrb[0].mxu0
    %v925 = vadd.f32 0.0, %v924
    %v926 = vpop.f32.mrb[0].mxu0
    %927 = vdwg.mxu0
    %v928 = vadd.f32 %v855, %v925
    %v929 = vxor.u32 %v928, 2147483648
    %v930 = vmul.f32 %v929, 1.442695
    %v931 = vpow.pop %v930
    %v932 = vadd.f32 %v931, 1.0
    %v933 = vrcp.pop %v932
    %v934 = vmul.f32 1.0, %v933
    %v935 = vtanh.pop %v928
    %v936 = vmul.f32 %v934, %v842
    %938 = vrot.lane.b32.xlu0 %v935, 32
    %v939 = vpop.permute.xlu0 %938
    %v941 = vmul.f32 %v934, %v939
    %943 = vrot.lane.b32.xlu0 %v941, 32
    %v944 = vpop.permute.xlu0 %943
    %v946 = vadd.f32 %v936, %v944
    %v947 = vtanh.pop %v946
    %949 = vrot.lane.b32.xlu0 %v947, 32
    %v950 = vpop.permute.xlu0 %949
    %v952 = vmul.f32 %v934, %v950
    %954 = vrot.lane.b32.xlu0 %v952, 64
    %v955 = vpop.permute.xlu0 %954
    %957 = vst.msk [vmem:[#allocation3 + $0x7] sm:$0x1] %vm227, %v955
    %958 = vst.msk [vmem:[#allocation3] sm:$0x1] %vm229, %v955
    %v959 = vld [vmem:[#allocation3] sm:$0xff]
    %v960 = vld [vmem:[%s4] sm:$0xff]
    %v961 = vld [vmem:[%s4 + $0x8] sm:$0xff]
    %v962 = vld [vmem:[%s4 + $0x10] sm:$0xff]
    %v963 = vld [vmem:[%s4 + $0x18] sm:$0xff]
    %v964 = vld [vmem:[%s5] sm:$0x1]
    %v966 = vlaneseq
    %v967 = vshrl.u32 %v966, 7
    %v968 = vsub.s32 0, %v967
    %v969 = vrot.slane %v964, %v968
    %v972 = vsel %vm45, %v959, 0
    %974 = vmatprep.subr.mxu0 0.0
    %975 = vmatpush1.msra.mxu0 %v960
    %976 = vmatprep.subr.mxu0 0.0
    %977 = vmatpush1.msra.mxu0 %v961
    %978 = vmatprep.subr.mxu0 0.0
    %979 = vmatpush1.msra.mxu0 %v962
    %980 = vmatprep.subr.mxu0 0.0
    %981 = vmatpush1.msra.mxu0 %v963
    %982 = vmatprep.subr.mxu0 0.0
    %983 = vmatpush1.msra.mxu0 0.0
    %984 = vmatprep.subr.mxu0 0.0
    %985 = vmatpush1.msra.mxu0 0.0
    %986 = vmatprep.subr.mxu0 0.0
    %987 = vmatpush1.msra.mxu0 0.0
    %988 = vmatprep.subr.mxu0 0.0
    %989 = vmatpush1.msra.mxu0 0.0
    %990 = vmatprep.subr.mxu0 0.0
    %991 = vmatpush1.msra.mxu0 0.0
    %992 = vmatprep.subr.mxu0 0.0
    %993 = vmatpush1.msra.mxu0 0.0
    %994 = vmatprep.subr.mxu0 0.0
    %995 = vmatpush1.msra.mxu0 0.0
    %996 = vmatprep.subr.mxu0 0.0
    %997 = vmatpush1.msra.mxu0 0.0
    %998 = vmatprep.subr.mxu0 0.0
    %999 = vmatpush1.msra.mxu0 0.0
    %1000 = vmatprep.subr.mxu0 0.0
    %1001 = vmatpush1.msra.mxu0 0.0
    %1002 = vmatprep.subr.mxu0 0.0
    %1003 = vmatpush1.msra.mxu0 0.0
    %1004 = vmatprep.subr.mxu0 0.0
    %1005 = vmatpush1.msra.mxu0 0.0
    %1006 = vmatprep.subr.mxu0 0.0
    %1007 = vmatpush1.msra.mxu0 0.0
    %1008 = vmatprep.subr.mxu0 0.0
    %1009 = vmatpush1.msra.mxu0 0.0
    %1010 = vmatprep.subr.mxu0 0.0
    %1011 = vmatpush1.msra.mxu0 0.0
    %1012 = vmatprep.subr.mxu0 0.0
    %1013 = vmatpush1.msra.mxu0 0.0
    %1014 = vmatprep.subr.mxu0 0.0
    %1015 = vmatpush1.msra.mxu0 0.0
    %1016 = vmatprep.subr.mxu0 0.0
    %1017 = vmatpush1.msra.mxu0 0.0
    %1018 = vmatprep.subr.mxu0 0.0
    %1019 = vmatpush1.msra.mxu0 0.0
    %1020 = vmatprep.subr.mxu0 0.0
    %1021 = vmatpush1.msra.mxu0 0.0
    %1022 = vmatprep.subr.mxu0 0.0
    %1023 = vmatpush1.msra.mxu0 0.0
    %1024 = vmatprep.subr.mxu0 0.0
    %1025 = vmatpush1.msra.mxu0 0.0
    %1026 = vmatprep.subr.mxu0 0.0
    %1027 = vmatpush1.msra.mxu0 0.0
    %1028 = vmatprep.subr.mxu0 0.0
    %1029 = vmatpush1.msra.mxu0 0.0
    %1030 = vmatprep.subr.mxu0 0.0
    %1031 = vmatpush1.msra.mxu0 0.0
    %1032 = vmatprep.subr.mxu0 0.0
    %1033 = vmatpush1.msra.mxu0 0.0
    %1034 = vmatprep.subr.mxu0 0.0
    %1035 = vmatpush1.msra.mxu0 0.0
    %1036 = vmatprep.subr.mxu0 0.0
    %1037 = vmatpush1.msra.mxu0 0.0
    %1038 = vmatprep.mubr.f32.mxu0 0.0
    %1039 = vmatmul.mubr.f32.gmra.mrb[0].mxu0 %v972
    %v1040 = vpop.f32.mrb[0].mxu0
    %v1041 = vadd.f32 %v969, %v1040
    %v1042 = vpop.f32.mrb[0].mxu0
    %1043 = vdwg.mxu0
    %vm1044 = vcmask 39936
    %1045 = vst.msk [vmem:[#allocation4] sm:$0xff] %vm1044, %v1041
    %v1046 = vld [vmem:[%s6] sm:$0x1f]
    %v1047 = vlaneseq
    %v1048 = vand.u32 %v1047, 127
    %v1049 = vlaneseq
    %v1050 = vshrl.u32 %v1049, 7
    %vm1051 = vcmp.eq.s32.totalorder %v1050, %v1048
    %vm1052 = vcmp.eq.s32.totalorder %v1048, 3
    %v1053 = vsel %vm1052, 0.0, -10000.0
    %v1054 = vadd.f32 %v1053, %v1046
    %vm1055 = vcmask 36864
    %v1056 = vsel %vm1055, %v1054, -inf
    %1057 = vmax.xlane.f32.xlu0 %v1056
    %v1058 = vpop.xlane.xlu0 %1057
    %vm1059 = vcmp.eq.f32.partialorder %v1054, %v1058
    %v1060 = vsel %vm1059, %v1048, 5
    %v1061 = vsel %vm1055, %v1060, 2147483647
    %v1062 = vand.u32 %v1061, 65535
    %v1063 = vshra.s32 %v1061, 16
    %v1064 = vcvt.s32.f32 %v1062
    %v1065 = vcvt.s32.f32 %v1063
    %1066 = vmin.xlane.f32.xlu0 %v1065
    %v1067 = vpop.xlane.xlu0 %1066
    %vm1068 = vcmp.eq.f32.partialorder %v1065, %v1067
    %v1069 = vsel %vm1068, %v1064, inf
    %1070 = vmin.xlane.f32.xlu0 %v1069
    %v1071 = vpop.xlane.xlu0 %1070
    %v1072 = vcvt.f32.s32 %v1071
    %v1073 = vcvt.f32.s32 %v1067
    %v1074 = vshll.u32 %v1073, 16
    %v1075 = vadd.s32 %v1074, %v1072
    %v1076 = vsel %vm1051, %v1058, 0.0
    %v1077 = vsel %vm1055, %v1076, 0.0
    %v1078 = vrot.slane %v1077, 4
    %v1079 = vadd.f32 %v1077, %v1078
    %v1080 = vrot.slane %v1079, 2
    %v1081 = vadd.f32 %v1079, %v1080
    %v1082 = vrot.slane %v1081, 1
    %v1083 = vadd.f32 %v1081, %v1082
    %v1084 = vadd.f32 %v1083, %v1041
    %v1085 = vlaneseq
    %v1086 = vshrl.u32 %v1085, 7
    %v1087 = vsub.s32 0, %v1086
    %v1088 = vrot.slane %v1084, %v1087
    %v1089 = vadd.f32 %v1088, %v1046
    %v1090 = vsel %vm1055, %v1089, -inf
    %1091 = vmax.xlane.f32.xlu0 %v1090
    %v1092 = vpop.xlane.xlu0 %1091
    %vm1093 = vcmp.eq.f32.partialorder %v1089, %v1092
    %v1094 = vsel %vm1093, %v1048, 5
    %v1095 = vsel %vm1055, %v1094, 2147483647
    %v1096 = vand.u32 %v1095, 65535
    %v1097 = vshra.s32 %v1095, 16
    %v1098 = vcvt.s32.f32 %v1096
    %v1099 = vcvt.s32.f32 %v1097
    %1100 = vmin.xlane.f32.xlu0 %v1099
    %v1101 = vpop.xlane.xlu0 %1100
    %vm1102 = vcmp.eq.f32.partialorder %v1099, %v1101
    %v1103 = vsel %vm1102, %v1098, inf
    %1104 = vmin.xlane.f32.xlu0 %v1103
    %v1105 = vpop.xlane.xlu0 %1104
    %v1106 = vcvt.f32.s32 %v1105
    %v1107 = vcvt.f32.s32 %v1101
    %v1108 = vshll.u32 %v1107, 16
    %v1109 = vadd.s32 %v1108, %v1106
    %v1110 = vsel %vm1051, %v1092, 0.0
    %v1111 = vsel %vm1055, %v1110, 0.0
    %v1112 = vrot.slane %v1111, 4
    %v1113 = vadd.f32 %v1111, %v1112
    %v1114 = vrot.slane %v1113, 2
    %v1115 = vadd.f32 %v1113, %v1114
    %v1116 = vrot.slane %v1115, 1
    %v1117 = vadd.f32 %v1115, %v1116
    %v1118 = vadd.f32 %v1117, %v1041
    %v1119 = vlaneseq
    %v1120 = vshrl.u32 %v1119, 7
    %v1121 = vsub.s32 1, %v1120
    %v1122 = vrot.slane %v1118, %v1121
    %v1123 = vadd.f32 %v1122, %v1046
    %v1124 = vsel %vm1055, %v1123, -inf
    %1125 = vmax.xlane.f32.xlu0 %v1124
    %v1126 = vpop.xlane.xlu0 %1125
    %vm1127 = vcmp.eq.f32.partialorder %v1123, %v1126
    %v1128 = vsel %vm1127, %v1048, 5
    %v1129 = vsel %vm1055, %v1128, 2147483647
    %v1130 = vand.u32 %v1129, 65535
    %v1131 = vshra.s32 %v1129, 16
    %v1132 = vcvt.s32.f32 %v1130
    %v1133 = vcvt.s32.f32 %v1131
    %1134 = vmin.xlane.f32.xlu0 %v1133
    %v1135 = vpop.xlane.xlu0 %1134
    %vm1136 = vcmp.eq.f32.partialorder %v1133, %v1135
    %v1137 = vsel %vm1136, %v1132, inf
    %1138 = vmin.xlane.f32.xlu0 %v1137
    %v1139 = vpop.xlane.xlu0 %1138
    %v1140 = vcvt.f32.s32 %v1139
    %v1141 = vcvt.f32.s32 %v1135
    %v1142 = vshll.u32 %v1141, 16
    %v1143 = vadd.s32 %v1142, %v1140
    %v1144 = vsel %vm1051, %v1126, 0.0
    %v1145 = vsel %vm1055, %v1144, 0.0
    %v1146 = vrot.slane %v1145, 4
    %v1147 = vadd.f32 %v1145, %v1146
    %v1148 = vrot.slane %v1147, 2
    %v1149 = vadd.f32 %v1147, %v1148
    %v1150 = vrot.slane %v1149, 1
    %v1151 = vadd.f32 %v1149, %v1150
    %v1152 = vadd.f32 %v1151, %v1041
    %v1153 = vlaneseq
    %v1154 = vshrl.u32 %v1153, 7
    %v1155 = vsub.s32 2, %v1154
    %v1156 = vrot.slane %v1152, %v1155
    %v1157 = vadd.f32 %v1156, %v1046
    %v1158 = vsel %vm1055, %v1157, -inf
    %1159 = vmax.xlane.f32.xlu0 %v1158
    %v1160 = vpop.xlane.xlu0 %1159
    %vm1161 = vcmp.eq.f32.partialorder %v1157, %v1160
    %v1162 = vsel %vm1161, %v1048, 5
    %v1163 = vsel %vm1055, %v1162, 2147483647
    %v1164 = vand.u32 %v1163, 65535
    %v1165 = vshra.s32 %v1163, 16
    %v1166 = vcvt.s32.f32 %v1164
    %v1167 = vcvt.s32.f32 %v1165
    %1168 = vmin.xlane.f32.xlu0 %v1167
    %v1169 = vpop.xlane.xlu0 %1168
    %vm1170 = vcmp.eq.f32.partialorder %v1167, %v1169
    %v1171 = vsel %vm1170, %v1166, inf
    %1172 = vmin.xlane.f32.xlu0 %v1171
    %v1173 = vpop.xlane.xlu0 %1172
    %v1174 = vcvt.f32.s32 %v1173
    %v1175 = vcvt.f32.s32 %v1169
    %v1176 = vshll.u32 %v1175, 16
    %v1177 = vadd.s32 %v1176, %v1174
    %v1178 = vsel %vm1051, %v1160, 0.0
    %v1179 = vsel %vm1055, %v1178, 0.0
    %v1180 = vrot.slane %v1179, 4
    %v1181 = vadd.f32 %v1179, %v1180
    %v1182 = vrot.slane %v1181, 2
    %v1183 = vadd.f32 %v1181, %v1182
    %v1184 = vrot.slane %v1183, 1
    %v1185 = vadd.f32 %v1183, %v1184
    %v1186 = vadd.f32 %v1185, %v1041
    %v1187 = vlaneseq
    %v1188 = vshrl.u32 %v1187, 7
    %v1189 = vsub.s32 3, %v1188
    %v1190 = vrot.slane %v1186, %v1189
    %v1191 = vadd.f32 %v1190, %v1046
    %v1192 = vsel %vm1055, %v1191, -inf
    %1193 = vmax.xlane.f32.xlu0 %v1192
    %v1194 = vpop.xlane.xlu0 %1193
    %vm1195 = vcmp.eq.f32.partialorder %v1191, %v1194
    %v1196 = vsel %vm1195, %v1048, 5
    %v1197 = vsel %vm1055, %v1196, 2147483647
    %v1198 = vand.u32 %v1197, 65535
    %v1199 = vshra.s32 %v1197, 16
    %v1200 = vcvt.s32.f32 %v1198
    %v1201 = vcvt.s32.f32 %v1199
    %1202 = vmin.xlane.f32.xlu0 %v1201
    %v1203 = vpop.xlane.xlu0 %1202
    %vm1204 = vcmp.eq.f32.partialorder %v1201, %v1203
    %v1205 = vsel %vm1204, %v1200, inf
    %1206 = vmin.xlane.f32.xlu0 %v1205
    %v1207 = vpop.xlane.xlu0 %1206
    %v1208 = vcvt.f32.s32 %v1207
    %v1209 = vcvt.f32.s32 %v1203
    %v1210 = vshll.u32 %v1209, 16
    %v1211 = vadd.s32 %v1210, %v1208
    %v1212 = vsel %vm1051, %v1194, 0.0
    %v1213 = vsel %vm1055, %v1212, 0.0
    %v1214 = vrot.slane %v1213, 4
    %v1215 = vadd.f32 %v1213, %v1214
    %v1216 = vrot.slane %v1215, 2
    %v1217 = vadd.f32 %v1215, %v1216
    %v1218 = vrot.slane %v1217, 1
    %v1219 = vadd.f32 %v1217, %v1218
    %v1220 = vadd.f32 %v1219, %v1041
    %v1221 = vlaneseq
    %v1222 = vshrl.u32 %v1221, 7
    %v1223 = vsub.s32 4, %v1222
    %v1224 = vrot.slane %v1220, %v1223
    %v1225 = vadd.f32 %v1224, %v1046
    %v1226 = vsel %vm1055, %v1225, -inf
    %1227 = vmax.xlane.f32.xlu0 %v1226
    %v1228 = vpop.xlane.xlu0 %1227
    %vm1229 = vcmp.eq.f32.partialorder %v1225, %v1228
    %v1230 = vsel %vm1229, %v1048, 5
    %v1231 = vsel %vm1055, %v1230, 2147483647
    %v1232 = vand.u32 %v1231, 65535
    %v1233 = vshra.s32 %v1231, 16
    %v1234 = vcvt.s32.f32 %v1232
    %v1235 = vcvt.s32.f32 %v1233
    %1236 = vmin.xlane.f32.xlu0 %v1235
    %v1237 = vpop.xlane.xlu0 %1236
    %vm1238 = vcmp.eq.f32.partialorder %v1235, %v1237
    %v1239 = vsel %vm1238, %v1234, inf
    %1240 = vmin.xlane.f32.xlu0 %v1239
    %v1241 = vpop.xlane.xlu0 %1240
    %v1242 = vcvt.f32.s32 %v1241
    %v1243 = vcvt.f32.s32 %v1237
    %v1244 = vshll.u32 %v1243, 16
    %v1245 = vadd.s32 %v1244, %v1242
    %v1246 = vsel %vm1051, %v1228, 0.0
    %v1247 = vsel %vm1055, %v1246, 0.0
    %v1248 = vrot.slane %v1247, 4
    %v1249 = vadd.f32 %v1247, %v1248
    %v1250 = vrot.slane %v1249, 2
    %v1251 = vadd.f32 %v1249, %v1250
    %v1252 = vrot.slane %v1251, 1
    %v1253 = vadd.f32 %v1251, %v1252
    %v1254 = vadd.f32 %v1253, %v1041
    %v1255 = vlaneseq
    %v1256 = vshrl.u32 %v1255, 7
    %v1257 = vsub.s32 5, %v1256
    %v1258 = vrot.slane %v1254, %v1257
    %v1259 = vadd.f32 %v1258, %v1046
    %v1260 = vsel %vm1055, %v1259, -inf
    %1261 = vmax.xlane.f32.xlu0 %v1260
    %v1262 = vpop.xlane.xlu0 %1261
    %vm1263 = vcmp.eq.f32.partialorder %v1259, %v1262
    %v1264 = vsel %vm1263, %v1048, 5
    %v1265 = vsel %vm1055, %v1264, 2147483647
    %v1266 = vand.u32 %v1265, 65535
    %v1267 = vshra.s32 %v1265, 16
    %v1268 = vcvt.s32.f32 %v1266
    %v1269 = vcvt.s32.f32 %v1267
    %1270 = vmin.xlane.f32.xlu0 %v1269
    %v1271 = vpop.xlane.xlu0 %1270
    %vm1272 = vcmp.eq.f32.partialorder %v1269, %v1271
    %v1273 = vsel %vm1272, %v1268, inf
    %1274 = vmin.xlane.f32.xlu0 %v1273
    %v1275 = vpop.xlane.xlu0 %1274
    %v1276 = vcvt.f32.s32 %v1275
    %v1277 = vcvt.f32.s32 %v1271
    %v1278 = vshll.u32 %v1277, 16
    %v1279 = vadd.s32 %v1278, %v1276
    %v1280 = vsel %vm1051, %v1262, 0.0
    %v1281 = vsel %vm1055, %v1280, 0.0
    %v1282 = vrot.slane %v1281, 4
    %v1283 = vadd.f32 %v1281, %v1282
    %v1284 = vrot.slane %v1283, 2
    %v1285 = vadd.f32 %v1283, %v1284
    %v1286 = vrot.slane %v1285, 1
    %v1287 = vadd.f32 %v1285, %v1286
    %v1288 = vadd.f32 %v1287, %v1041
    %v1289 = vlaneseq
    %v1290 = vshrl.u32 %v1289, 7
    %v1291 = vsub.s32 6, %v1290
    %v1292 = vrot.slane %v1288, %v1291
    %v1293 = vadd.f32 %v1292, %v1046
    %v1294 = vsel %vm1055, %v1293, -inf
    %1295 = vmax.xlane.f32.xlu0 %v1294
    %v1296 = vpop.xlane.xlu0 %1295
    %vm1297 = vcmp.eq.f32.partialorder %v1293, %v1296
    %v1298 = vsel %vm1297, %v1048, 5
    %v1299 = vsel %vm1055, %v1298, 2147483647
    %v1300 = vand.u32 %v1299, 65535
    %v1301 = vshra.s32 %v1299, 16
    %v1302 = vcvt.s32.f32 %v1300
    %v1303 = vcvt.s32.f32 %v1301
    %1304 = vmin.xlane.f32.xlu0 %v1303
    %v1305 = vpop.xlane.xlu0 %1304
    %vm1306 = vcmp.eq.f32.partialorder %v1303, %v1305
    %v1307 = vsel %vm1306, %v1302, inf
    %1308 = vmin.xlane.f32.xlu0 %v1307
    %v1309 = vpop.xlane.xlu0 %1308
    %v1310 = vcvt.f32.s32 %v1309
    %v1311 = vcvt.f32.s32 %v1305
    %v1312 = vshll.u32 %v1311, 16
    %v1313 = vadd.s32 %v1312, %v1310
    %v1314 = vsel %vm1051, %v1296, 0.0
    %v1315 = vsel %vm1055, %v1314, 0.0
    %v1316 = vrot.slane %v1315, 4
    %v1317 = vadd.f32 %v1315, %v1316
    %v1318 = vrot.slane %v1317, 2
    %v1319 = vadd.f32 %v1317, %v1318
    %v1320 = vrot.slane %v1319, 1
    %v1321 = vadd.f32 %v1319, %v1320
    %v1322 = vadd.f32 %v1321, %v1041
    %vm1323 = vcmask 7168
    %v1324 = vsel %vm1323, %v1075, %v1109
    %vm1325 = vcmask 15360
    %v1326 = vsel %vm1325, %v1324, %v1143
    %vm1327 = vcmask 23552
    %v1328 = vsel %vm1327, %v1326, %v1177
    %vm1329 = vcmask 31744
    %v1330 = vsel %vm1329, %v1328, %v1211
    %v1331 = vsel %vm1044, %v1330, %v1245
    %vm1332 = vcmask 48128
    %v1333 = vsel %vm1332, %v1331, %v1279
    %vm1334 = vcmask 56320
    %v1335 = vsel %vm1334, %v1333, %v1313
    %vm1336 = vcmask 61440
    %1337 = vst.msk [vmem:[%s9] sm:$0x1f] %vm1336, %v1335
    %v1338 = vld [vmem:[%s7] sm:$0x1]
    %v1340 = vlaneseq
    %v1341 = vshrl.u32 %v1340, 7
    %v1342 = vsub.s32 0, %v1341
    %v1343 = vrot.slane %v1338, %v1342
    %v1345 = vadd.f32 %v1322, %v1343
    %vm1346 = vcmask 39943
    %1347 = vst.msk [vmem:[%s10 - $0x7] sm:$0x80] %vm1346, %v1345
    // Predicated region
    $region34: #{_forward_device.1} parent=1 // pred_check
      _
    $region35: #{_forward_device.1} parent=1 // pred_check_branch
      %1349 = sbr.rel (0) target = $region37
    $region36: #{_forward_device.1} parent=1 // pred_region
      %s1351 = ssub.s32 128, 128
      %1352 = vsyncadd [#allocation5], %s1351
      %s1354 = sshll.u32 [#allocation4], 4
      %s1355 = int_to_ptr.vmem [resolvable:$true] %s1354
      %1357 = dma.vmem_to_hbm [thread:$0]  %s1355, 128, %s8, [#allocation5]
    $region37: #{_forward_device.1} parent=1 // pred_fallthru
      _
    // Predicated region
    $region38: #{_forward_device.1} parent=1 // pred_check
      _
    $region39: #{_forward_device.1} parent=1 // pred_check_branch
      %1359 = sbr.rel (0) target = $region41
    $region40: #{_forward_device.1} parent=1 // pred_region
      _
    $region41: #{_forward_device.1} parent=1 // pred_fallthru
      _
    // Predicated region
    $region42: #{_forward_device.1} parent=1 // pred_check
      _
    $region43: #{_forward_device.1} parent=1 // pred_check_branch
      %1361 = sbr.rel (0) target = $region45
    $region44: #{_forward_device.1} parent=1 // pred_region
      _
    $region45: #{_forward_device.1} parent=1 // pred_fallthru
      _
    // Predicated region
    $region46: #{_forward_device.1} parent=1 // pred_check
      _
    $region47: #{_forward_device.1} parent=1 // pred_check_branch
      %1363 = sbr.rel (0) target = $region49
    $region48: #{_forward_device.1} parent=1 // pred_region
      %1364 = dma.done [#allocation5], 128
    $region49: #{_forward_device.1} parent=1 // pred_fallthru
      _
    // Predicated region
    $region50: #{_forward_device.1} parent=1 // pred_check
      _
    $region51: #{_forward_device.1} parent=1 // pred_check_branch
      %1366 = sbr.rel (0) target = $region53
    $region52: #{_forward_device.1} parent=1 // pred_region
      _
    $region53: #{_forward_device.1} parent=1 // pred_fallthru
      _
    // Predicated region
    $region54: #{_forward_device.1} parent=1 // pred_check
      _
    $region55: #{_forward_device.1} parent=1 // pred_check_branch
      %1368 = sbr.rel (0) target = $region57
    $region56: #{_forward_device.1} parent=1 // pred_region
      _
    $region57: #{_forward_device.1} parent=1 // pred_fallthru
      _
    %1369 = vsyncpa [#allocation5], 1

</llo_original>
